<compile_context>
chip_gen: v7x
topology: tpu7x:2x2x1
jax: 0.10.0
libtpu: 0.0.40
codegen_flags: <defaults>
</compile_context>

<pallas_src>
import functools

import jax
import jax.numpy as jnp
from jax import lax
from jax.experimental import pallas as pl
from jax.experimental.pallas import tpu as pltpu


_GATHER_UNROLL = 8


def _gnn_layer_kernel(blk_off_ref, blk_cnt_ref, src_ref,          # SMEM prefetch
                      h_ref, xe_ref, dst_ref, w1_ref, w2_ref, scale_ref,
                      out_ref,                                     # VMEM output
                      acc_ref, hg_ref,                             # VMEM scratch
                      *, te, tn, res_conn):
    n_idx = pl.program_id(0)
    e_idx = pl.program_id(1)
    node_start = pl.multiple_of(n_idx * tn, tn)

    # ---- init the per-node-tile accumulator on the first edge step --------
    @pl.when(e_idx == 0)
    def _init():
        acc_ref[...] = jnp.zeros_like(acc_ref)

    # ---- process one edge block of THIS node tile's (dst-sorted) edges ----
    @pl.when(e_idx < blk_cnt_ref[n_idx])
    def _edge_block():
        blk = blk_off_ref[n_idx] + e_idx
        edge_base = pl.multiple_of(blk * te, te)

        # gather H[idx_src] rows for this edge block (SMEM indices -> VMEM rows)
        def gather_block(jo, carry):
            j0 = pl.multiple_of(jo * _GATHER_UNROLL, _GATHER_UNROLL)
            for u in range(_GATHER_UNROLL):            # unrolled for ld/st overlap
                j = j0 + u
                src = src_ref[edge_base + j]
                hg_ref[pl.ds(j, 1), :] = h_ref[pl.ds(src, 1), :]
            return carry

        lax.fori_loop(0, te // _GATHER_UNROLL, gather_block, 0)

        # fused per-edge MLP: y = relu([H_src | X_e] @ W1), single K = d_h+d_e
        x_cat = jnp.concatenate(
            [hg_ref[...].astype(jnp.bfloat16), xe_ref[...]], axis=1)   # [te, d_h+d_e]
        y = jnp.dot(x_cat, w1_ref[...], preferred_element_type=jnp.float32)
        y = jnp.maximum(y, 0.0).astype(jnp.bfloat16)                    # [te, hidden]

        # scatter-add into this node tile via a transposed one-hot (tn, te) @ y.
        # Out-of-tile / padded destinations (dst >= node_start + tn or dst < node_start)
        # produce all-zero columns and contribute nothing.
        node_ids = lax.broadcasted_iota(jnp.int32, (tn, te), 0) + node_start
        onehot_t = (node_ids == dst_ref[0]).astype(jnp.bfloat16)        # [tn, te]
        acc_ref[...] += jnp.dot(onehot_t, y, preferred_element_type=jnp.float32)

    # ---- finalize this node tile on the last edge step --------------------
    @pl.when(e_idx == pl.num_programs(1) - 1)
    def _finalize():
        h_tile = h_ref[pl.ds(node_start, tn), :]                        # [tn, d_h] f32
        y_agg = (acc_ref[...] * scale_ref[...]).astype(jnp.bfloat16)    # [tn, hidden]
        cat2 = jnp.concatenate([h_tile.astype(jnp.bfloat16), y_agg], axis=1)
        y2 = jnp.dot(cat2, w2_ref[...], preferred_element_type=jnp.float32)
        y2 = jnp.maximum(y2, 0.0)
        if res_conn:
            y2 = y2 + h_tile                                            # residual in f32
        out_ref[...] = y2


def gnn_layer_forward(H, idx, X_e, W1, W2, *, aggr_type="sum", res_conn=True,
                      edge_tile=256, node_tile=256):
    """Pallas implementation of GNN_Layer.forward.

    H   : [N, d_h] f32            node embeddings
    idx : [2, E]  int32           idx[0] = source node, idx[1] = destination node
    X_e : [E, d_e] f32            edge features
    W1  : [d_h + d_e, hidden]     f32
    W2  : [d_h + hidden, hidden]  f32
    """
    N, d_h = H.shape
    E, d_e = X_e.shape
    hidden = W1.shape[1]
    assert W1.shape[0] == d_h + d_e
    assert W2.shape == (d_h + hidden, hidden)
    assert E >= 1
    if res_conn:
        assert hidden == d_h, "res_conn=True requires hidden_dim == d_h"
    if aggr_type == "max":
        # TODO(synk): 'max' scatter aggregation (running per-tile elementwise max)
        # is not implemented in-kernel.
        raise NotImplementedError("aggr_type 'max' not implemented")
    assert aggr_type in ("sum", "mean")
    # lane-aligned feature dims keep the fused [H_src|X_e] / [H|y] layouts dense.
    assert d_h % 128 == 0 and d_e % 128 == 0 and hidden % 128 == 0

    te = int(edge_tile)
    tn = int(node_tile)
    assert te % _GATHER_UNROLL == 0 and te % 128 == 0
    assert tn % 8 == 0

    # ---- tiling / padding --------------------------------------------------
    N_pad = -(-N // tn) * tn
    E_pad = -(-E // te) * te
    n_node_tiles = N_pad // tn
    n_edge_blocks = E_pad // te

    # ---- wrapper-side glue: sort edges by destination, build block offsets -
    idx = idx.astype(jnp.int32)
    order = jnp.argsort(idx[1])
    src_s = idx[0][order]
    dst_s = idx[1][order]
    xe_s = X_e.astype(jnp.bfloat16)[order]

    pad_e = E_pad - E
    # padded sources read H row 0 (safe: their one-hot column is zero);
    # padded destinations point at N_pad (outside every node tile).
    src_p = jnp.concatenate([src_s, jnp.zeros((pad_e,), jnp.int32)])
    dst_p = jnp.concatenate([dst_s, jnp.full((pad_e,), N_pad, jnp.int32)])
    xe_p = jnp.concatenate([xe_s, jnp.zeros((pad_e, d_e), jnp.bfloat16)])
    dst_rows = dst_p.reshape(n_edge_blocks, 1, te)        # lane-dense blocks

    bounds = jnp.arange(n_node_tiles + 1, dtype=jnp.int32) * tn
    cum = jnp.searchsorted(dst_s, bounds, side="left").astype(jnp.int32)
    start, end = cum[:-1], cum[1:]
    blk_off = (start // te).astype(jnp.int32)
    blk_cnt = jnp.where(end > start,
                        (end - 1) // te - start // te + 1, 0).astype(jnp.int32)
    # static edge-axis extent = worst case blocks per node tile (concrete value;
    # makes this wrapper non-jittable, which is fine for this script).
    max_blocks = max(int(jnp.max(blk_cnt)), 1)

    Hf = H.astype(jnp.float32)
    if N_pad != N:
        Hf = jnp.concatenate([Hf, jnp.zeros((N_pad - N, d_h), jnp.float32)])

    W1b = W1.astype(jnp.bfloat16)                  # [d_h + d_e, hidden]
    W2b = W2.astype(jnp.bfloat16)                  # [d_h + hidden, hidden]

    # degree bookkeeping outside the kernel ('mean' == sum * 1/deg)
    if aggr_type == "mean":
        deg = jax.ops.segment_sum(jnp.ones((E,), jnp.float32), idx[1],
                                  num_segments=N)
        scale = 1.0 / jnp.maximum(deg, 1.0)
    else:
        scale = jnp.ones((N,), jnp.float32)
    if N_pad != N:
        scale = jnp.concatenate([scale, jnp.ones((N_pad - N,), jnp.float32)])
    scale = scale.reshape(N_pad, 1)

    # ---- generation-aware VMEM budget --------------------------------------
    try:
        vmem_cap = int(getattr(pltpu.get_tpu_info(), "vmem_capacity_bytes",
                               64 * 1024 * 1024))
    except Exception:
        vmem_cap = 64 * 1024 * 1024                # conservative v7x default
    est = 2 * (Hf.size * 4 + W1b.size * 2 + W2b.size * 2      # resident (2 bufs)
               + te * d_e * 2 + 8 * te * 4                    # X_e + dst tiles
               + tn * 128 * 4 + tn * hidden * 4)              # scale + out tiles
    est += tn * hidden * 4 + te * d_h * 4                     # acc + gather scratch
    vmem_limit = int(min(int(0.9 * vmem_cap), max(2 * est, 32 * 1024 * 1024)))

    kernel = functools.partial(_gnn_layer_kernel, te=te, tn=tn, res_conn=res_conn)

    def _edge_blk(n, e, off, cnt, src):
        # clamp: steps past this node tile's block count are skipped in-kernel
        return (jnp.minimum(off[n] + e, n_edge_blocks - 1), 0)

    grid_spec = pltpu.PrefetchScalarGridSpec(
        num_scalar_prefetch=3,
        grid=(n_node_tiles, max_blocks),
        in_specs=[
            pl.BlockSpec((N_pad, d_h), lambda n, e, off, cnt, src: (0, 0)),   # H resident
            pl.BlockSpec((te, d_e), _edge_blk),                               # X_e tile
            pl.BlockSpec((1, 1, te),
                         lambda n, e, off, cnt, src:
                         (jnp.minimum(off[n] + e, n_edge_blocks - 1), 0, 0)), # dst tile
            pl.BlockSpec((d_h + d_e, hidden), lambda n, e, off, cnt, src: (0, 0)),   # W1
            pl.BlockSpec((d_h + hidden, hidden), lambda n, e, off, cnt, src: (0, 0)),# W2
            pl.BlockSpec((tn, 1), lambda n, e, off, cnt, src: (n, 0)),        # 1/deg
        ],
        out_specs=pl.BlockSpec((tn, hidden), lambda n, e, off, cnt, src: (n, 0)),
        scratch_shapes=[
            pltpu.VMEM((tn, hidden), jnp.float32),   # scatter accumulator
            pltpu.VMEM((te, d_h), jnp.float32),      # gathered H rows
        ],
    )

    out = pl.pallas_call(
        kernel,
        out_shape=jax.ShapeDtypeStruct((N_pad, hidden), jnp.float32),
        grid_spec=grid_spec,
        compiler_params=pltpu.CompilerParams(
            dimension_semantics=("parallel", "arbitrary"),
            vmem_limit_bytes=vmem_limit),
    )(blk_off, blk_cnt, src_p, Hf, xe_p, dst_rows, W1b, W2b, scale)
    return out[:N]


def _reference_forward(H, idx, X_e, W1, W2, *, aggr_type="sum", res_conn=True):
    """Pure-JAX f32 reference mirroring the PyTorch forward."""
    N = H.shape[0]
    x = jnp.concatenate([H[idx[0]], X_e], axis=1)
    y = jnp.maximum(x @ W1, 0.0)
    if aggr_type == "sum":
        y = jax.ops.segment_sum(y, idx[1], num_segments=N)
    elif aggr_type == "mean":
        s = jax.ops.segment_sum(y, idx[1], num_segments=N)
        c = jax.ops.segment_sum(jnp.ones((y.shape[0], 1)), idx[1], num_segments=N)
        y = s / jnp.maximum(c, 1.0)
    y = jnp.concatenate([H, y], axis=1)
    y = jnp.maximum(y @ W2, 0.0)
    if res_conn:
        y = y + H
    return y


def _check(out, ref, tag):
    err = float(jnp.max(jnp.abs(out - ref)) / (jnp.max(jnp.abs(ref)) + 1e-6))
    assert err < 3e-2, f"{tag}: relative max error {err:.4f} vs f32 reference"


if __name__ == "__main__":
    # Small but lane-aligned shapes; N=512 / tn=256 gives 2 node tiles and
    # E=2048 / te=256 exercises the data-dependent edge-block machinery.
    N, E = 512, 2048
    d_h = 128          # node embedding dim (== hidden so the residual works)
    d_e = 128          # edge feature dim
    hidden = 128
    dim_in = d_h + d_e           # 256
    hidden_dim2 = d_h + hidden   # 256

    key = jax.random.PRNGKey(0)
    k_h, k_e, k_idx, k_w1, k_w2 = jax.random.split(key, 5)

    H = jax.random.normal(k_h, (N, d_h), dtype=jnp.float32)
    X_e = jax.random.normal(k_e, (E, d_e), dtype=jnp.float32)
    idx = jax.random.randint(k_idx, (2, E), 0, N, dtype=jnp.int32)

    # kaiming_normal_ (fan_in = size(1), gain = sqrt(2)), deterministic.
    std = (2.0 / hidden) ** 0.5
    W1 = std * jax.random.normal(k_w1, (dim_in, hidden), dtype=jnp.float32)
    W2 = std * jax.random.normal(k_w2, (hidden_dim2, hidden), dtype=jnp.float32)

    out_sum = jax.block_until_ready(
        gnn_layer_forward(H, idx, X_e, W1, W2, aggr_type="sum", res_conn=True))
    ref_sum = _reference_forward(H, idx, X_e, W1, W2, aggr_type="sum", res_conn=True)
    assert out_sum.shape == (N, hidden)
    _check(out_sum, ref_sum, "sum")

    out_mean = jax.block_until_ready(
        gnn_layer_forward(H, idx, X_e, W1, W2, aggr_type="mean", res_conn=True))
    ref_mean = _reference_forward(H, idx, X_e, W1, W2, aggr_type="mean", res_conn=True)
    _check(out_mean, ref_mean, "mean")

    print("KERNEL_OK")
</pallas_src>

<mosaic_0001>
module attributes {stable_mosaic.version = 11 : i64} {
  func.func @_gnn_layer_kernel(%arg0: i32, %arg1: i32, %arg2: memref<2xi32, #tpu.memory_space<smem>>, %arg3: memref<2xi32, #tpu.memory_space<smem>>, %arg4: memref<2048xi32, #tpu.memory_space<smem>>, %arg5: memref<512x128xf32, #tpu.memory_space<vmem>>, %arg6: memref<256x128xbf16, #tpu.memory_space<vmem>>, %arg7: memref<1x1x256xi32, #tpu.memory_space<vmem>>, %arg8: memref<256x128xbf16, #tpu.memory_space<vmem>>, %arg9: memref<256x128xbf16, #tpu.memory_space<vmem>>, %arg10: memref<256x1xf32, #tpu.memory_space<vmem>>, %arg11: memref<256x128xf32, #tpu.memory_space<vmem>>, %arg12: memref<256x128xf32, #tpu.memory_space<vmem>>, %arg13: memref<256x128xf32, #tpu.memory_space<vmem>>) attributes {dimension_semantics = [#tpu.dimension_semantics<parallel>, #tpu.dimension_semantics<arbitrary>], iteration_bounds = array<i64: 2, 5>, scalar_prefetch = 3 : i64, scratch_operands = 2 : i64, tpu.core_type = #tpu.core_type<tc>, window_params = [{pipeline_mode = #tpu.pipeline_mode<synchronous>, transform_indices = @transform_0, window_bounds = array<i64: 512, 128>}, {transform_indices = @transform_1, window_bounds = array<i64: 256, 128>}, {transform_indices = @transform_2, window_bounds = array<i64: 1, 1, 256>}, {pipeline_mode = #tpu.pipeline_mode<synchronous>, transform_indices = @transform_3, window_bounds = array<i64: 256, 128>}, {pipeline_mode = #tpu.pipeline_mode<synchronous>, transform_indices = @transform_4, window_bounds = array<i64: 256, 128>}, {transform_indices = @transform_5, window_bounds = array<i64: 256, 1>}, {transform_indices = @transform_6, window_bounds = array<i64: 256, 128>}]} {
    %c256_i32 = arith.constant 256 : i32
    %0 = arith.muli %arg0, %c256_i32 : i32
    %1 = tpu.assume_multiple %0, 256 : i32
    %c0_i32 = arith.constant 0 : i32
    %2 = arith.cmpi eq, %arg1, %c0_i32 : i32
    %3 = arith.extui %2 : i1 to i32
    %c0_i32_0 = arith.constant 0 : i32
    %4 = arith.cmpi ne, %3, %c0_i32_0 : i32
    scf.if %4 {
      %cst = arith.constant 0.000000e+00 : f32
      %13 = vector.broadcast %cst : f32 to vector<256x128xf32>
      %c0 = arith.constant 0 : index
      %c0_3 = arith.constant 0 : index
      %14 = vector.load %arg12[%c0, %c0_3] : memref<256x128xf32, #tpu.memory_space<vmem>>, vector<256x128xf32>
      tpu.vector_store %arg12[%c0, %c0_3], %13 {strides = array<i32>} : memref<256x128xf32, #tpu.memory_space<vmem>>, vector<256x128xf32>,
    } else {
    }
    %5 = arith.index_cast %arg0 : i32 to index
    %6 = memref.load %arg3[%5] : memref<2xi32, #tpu.memory_space<smem>>
    %7 = arith.cmpi slt, %arg1, %6 : i32
    %8 = arith.extui %7 : i1 to i32
    %c0_i32_1 = arith.constant 0 : i32
    %9 = arith.cmpi ne, %8, %c0_i32_1 : i32
    scf.if %9 {
      %13 = arith.index_cast %arg0 : i32 to index
      %14 = memref.load %arg2[%13] : memref<2xi32, #tpu.memory_space<smem>>
      %15 = arith.addi %14, %arg1 : i32
      %c256_i32_3 = arith.constant 256 : i32
      %16 = arith.muli %15, %c256_i32_3 : i32
      %17 = tpu.assume_multiple %16, 256 : i32
      %c0_i32_4 = arith.constant 0 : i32
      %c32_i32 = arith.constant 32 : i32
      %18 = arith.addi %c0_i32_4, %c32_i32 : i32
      %c1_i32 = arith.constant 1 : i32
      scf.for %arg14 = %c0_i32_4 to %18 step %c1_i32  : i32 {
        %c8_i32 = arith.constant 8 : i32
        %42 = arith.muli %arg14, %c8_i32 : i32
        %43 = tpu.assume_multiple %42, 8 : i32
        %c0_i32_20 = arith.constant 0 : i32
        %44 = arith.addi %43, %c0_i32_20 : i32
        %45 = arith.addi %17, %44 : i32
        %46 = arith.index_cast %45 : i32 to index
        %47 = memref.load %arg4[%46] : memref<2048xi32, #tpu.memory_space<smem>>
        %48 = arith.index_cast %47 : i32 to index
        %c0_21 = arith.constant 0 : index
        %49 = vector.load %arg5[%48, %c0_21] : memref<512x128xf32, #tpu.memory_space<vmem>>, vector<1x128xf32>
        %50 = arith.index_cast %44 : i32 to index
        %c0_22 = arith.constant 0 : index
        %51 = vector.load %arg13[%50, %c0_22] : memref<256x128xf32, #tpu.memory_space<vmem>>, vector<1x128xf32>
        tpu.vector_store %arg13[%50, %c0_22], %49 {strides = array<i32>} : memref<256x128xf32, #tpu.memory_space<vmem>>, vector<1x128xf32>,
        %c1_i32_23 = arith.constant 1 : i32
        %52 = arith.addi %43, %c1_i32_23 : i32
        %53 = arith.addi %17, %52 : i32
        %54 = arith.index_cast %53 : i32 to index
        %55 = memref.load %arg4[%54] : memref<2048xi32, #tpu.memory_space<smem>>
        %56 = arith.index_cast %55 : i32 to index
        %c0_24 = arith.constant 0 : index
        %57 = vector.load %arg5[%56, %c0_24] : memref<512x128xf32, #tpu.memory_space<vmem>>, vector<1x128xf32>
        %58 = arith.index_cast %52 : i32 to index
        %c0_25 = arith.constant 0 : index
        %59 = vector.load %arg13[%58, %c0_25] : memref<256x128xf32, #tpu.memory_space<vmem>>, vector<1x128xf32>
        tpu.vector_store %arg13[%58, %c0_25], %57 {strides = array<i32>} : memref<256x128xf32, #tpu.memory_space<vmem>>, vector<1x128xf32>,
        %c2_i32 = arith.constant 2 : i32
        %60 = arith.addi %43, %c2_i32 : i32
        %61 = arith.addi %17, %60 : i32
        %62 = arith.index_cast %61 : i32 to index
        %63 = memref.load %arg4[%62] : memref<2048xi32, #tpu.memory_space<smem>>
        %64 = arith.index_cast %63 : i32 to index
        %c0_26 = arith.constant 0 : index
        %65 = vector.load %arg5[%64, %c0_26] : memref<512x128xf32, #tpu.memory_space<vmem>>, vector<1x128xf32>
        %66 = arith.index_cast %60 : i32 to index
        %c0_27 = arith.constant 0 : index
        %67 = vector.load %arg13[%66, %c0_27] : memref<256x128xf32, #tpu.memory_space<vmem>>, vector<1x128xf32>
        tpu.vector_store %arg13[%66, %c0_27], %65 {strides = array<i32>} : memref<256x128xf32, #tpu.memory_space<vmem>>, vector<1x128xf32>,
        %c3_i32 = arith.constant 3 : i32
        %68 = arith.addi %43, %c3_i32 : i32
        %69 = arith.addi %17, %68 : i32
        %70 = arith.index_cast %69 : i32 to index
        %71 = memref.load %arg4[%70] : memref<2048xi32, #tpu.memory_space<smem>>
        %72 = arith.index_cast %71 : i32 to index
        %c0_28 = arith.constant 0 : index
        %73 = vector.load %arg5[%72, %c0_28] : memref<512x128xf32, #tpu.memory_space<vmem>>, vector<1x128xf32>
        %74 = arith.index_cast %68 : i32 to index
        %c0_29 = arith.constant 0 : index
        %75 = vector.load %arg13[%74, %c0_29] : memref<256x128xf32, #tpu.memory_space<vmem>>, vector<1x128xf32>
        tpu.vector_store %arg13[%74, %c0_29], %73 {strides = array<i32>} : memref<256x128xf32, #tpu.memory_space<vmem>>, vector<1x128xf32>,
        %c4_i32_30 = arith.constant 4 : i32
        %76 = arith.addi %43, %c4_i32_30 : i32
        %77 = arith.addi %17, %76 : i32
        %78 = arith.index_cast %77 : i32 to index
        %79 = memref.load %arg4[%78] : memref<2048xi32, #tpu.memory_space<smem>>
        %80 = arith.index_cast %79 : i32 to index
        %c0_31 = arith.constant 0 : index
        %81 = vector.load %arg5[%80, %c0_31] : memref<512x128xf32, #tpu.memory_space<vmem>>, vector<1x128xf32>
        %82 = arith.index_cast %76 : i32 to index
        %c0_32 = arith.constant 0 : index
        %83 = vector.load %arg13[%82, %c0_32] : memref<256x128xf32, #tpu.memory_space<vmem>>, vector<1x128xf32>
        tpu.vector_store %arg13[%82, %c0_32], %81 {strides = array<i32>} : memref<256x128xf32, #tpu.memory_space<vmem>>, vector<1x128xf32>,
        %c5_i32 = arith.constant 5 : i32
        %84 = arith.addi %43, %c5_i32 : i32
        %85 = arith.addi %17, %84 : i32
        %86 = arith.index_cast %85 : i32 to index
        %87 = memref.load %arg4[%86] : memref<2048xi32, #tpu.memory_space<smem>>
        %88 = arith.index_cast %87 : i32 to index
        %c0_33 = arith.constant 0 : index
        %89 = vector.load %arg5[%88, %c0_33] : memref<512x128xf32, #tpu.memory_space<vmem>>, vector<1x128xf32>
        %90 = arith.index_cast %84 : i32 to index
        %c0_34 = arith.constant 0 : index
        %91 = vector.load %arg13[%90, %c0_34] : memref<256x128xf32, #tpu.memory_space<vmem>>, vector<1x128xf32>
        tpu.vector_store %arg13[%90, %c0_34], %89 {strides = array<i32>} : memref<256x128xf32, #tpu.memory_space<vmem>>, vector<1x128xf32>,
        %c6_i32 = arith.constant 6 : i32
        %92 = arith.addi %43, %c6_i32 : i32
        %93 = arith.addi %17, %92 : i32
        %94 = arith.index_cast %93 : i32 to index
        %95 = memref.load %arg4[%94] : memref<2048xi32, #tpu.memory_space<smem>>
        %96 = arith.index_cast %95 : i32 to index
        %c0_35 = arith.constant 0 : index
        %97 = vector.load %arg5[%96, %c0_35] : memref<512x128xf32, #tpu.memory_space<vmem>>, vector<1x128xf32>
        %98 = arith.index_cast %92 : i32 to index
        %c0_36 = arith.constant 0 : index
        %99 = vector.load %arg13[%98, %c0_36] : memref<256x128xf32, #tpu.memory_space<vmem>>, vector<1x128xf32>
        tpu.vector_store %arg13[%98, %c0_36], %97 {strides = array<i32>} : memref<256x128xf32, #tpu.memory_space<vmem>>, vector<1x128xf32>,
        %c7_i32 = arith.constant 7 : i32
        %100 = arith.addi %43, %c7_i32 : i32
        %101 = arith.addi %17, %100 : i32
        %102 = arith.index_cast %101 : i32 to index
        %103 = memref.load %arg4[%102] : memref<2048xi32, #tpu.memory_space<smem>>
        %104 = arith.index_cast %103 : i32 to index
        %c0_37 = arith.constant 0 : index
        %105 = vector.load %arg5[%104, %c0_37] : memref<512x128xf32, #tpu.memory_space<vmem>>, vector<1x128xf32>
        %106 = arith.index_cast %100 : i32 to index
        %c0_38 = arith.constant 0 : index
        %107 = vector.load %arg13[%106, %c0_38] : memref<256x128xf32, #tpu.memory_space<vmem>>, vector<1x128xf32>
        tpu.vector_store %arg13[%106, %c0_38], %105 {strides = array<i32>} : memref<256x128xf32, #tpu.memory_space<vmem>>, vector<1x128xf32>,
      }
      %c32_i32_5 = arith.constant 32 : i32
      %c0 = arith.constant 0 : index
      %c0_6 = arith.constant 0 : index
      %19 = vector.load %arg13[%c0, %c0_6] : memref<256x128xf32, #tpu.memory_space<vmem>>, vector<256x128xf32>
      %20 = arith.truncf %19 : vector<256x128xf32> to vector<256x128xbf16>
      %c0_7 = arith.constant 0 : index
      %c0_8 = arith.constant 0 : index
      %21 = vector.load %arg6[%c0_7, %c0_8] : memref<256x128xbf16, #tpu.memory_space<vmem>>, vector<256x128xbf16>
      %22 = tpu.concatenate %20, %21 in 1 : vector<256x128xbf16>, vector<256x128xbf16> -> vector<256x256xbf16>
      %c0_9 = arith.constant 0 : index
      %c0_10 = arith.constant 0 : index
      %23 = vector.load %arg8[%c0_9, %c0_10] : memref<256x128xbf16, #tpu.memory_space<vmem>>, vector<256x128xbf16>
      %cst = arith.constant dense<0.000000e+00> : vector<256x128xf32>
      %24 = tpu.matmul %22, %23, %cst {dimension_numbers = #tpu.dot_dimension_numbers<[1], [0], [0], [1], [0, 0, 1, 1], [], []>} : vector<256x256xbf16>, vector<256x128xbf16>, vector<256x128xf32> -> vector<256x128xf32>
      %cst_11 = arith.constant 0.000000e+00 : f32
      %25 = vector.broadcast %cst_11 : f32 to vector<256x128xf32>
      %26 = arith.maximumf %24, %25 : vector<256x128xf32>
      %27 = arith.truncf %26 : vector<256x128xf32> to vector<256x128xbf16>
      %28 = tpu.iota {dimensions = array<i32: 0>} : vector<256x256xi32>
      %29 = vector.broadcast %1 : i32 to vector<256x256xi32>
      %30 = arith.addi %28, %29 : vector<256x256xi32>
      %c0_12 = arith.constant 0 : index
      %c0_13 = arith.constant 0 : index
      %c0_14 = arith.constant 0 : index
      %31 = vector.load %arg7[%c0_12, %c0_13, %c0_14] : memref<1x1x256xi32, #tpu.memory_space<vmem>>, vector<1x1x256xi32>
      %32 = vector.shape_cast %31 : vector<1x1x256xi32> to vector<1x256xi32>
      %33 = vector.broadcast %32 : vector<1x256xi32> to vector<256x256xi32>
      %34 = arith.cmpi eq, %30, %33 : vector<256x256xi32>
      %35 = arith.extui %34 : vector<256x256xi1> to vector<256x256xi32>
      %36 = arith.sitofp %35 : vector<256x256xi32> to vector<256x256xf32>
      %37 = arith.truncf %36 : vector<256x256xf32> to vector<256x256xbf16>
      %c0_15 = arith.constant 0 : index
      %c0_16 = arith.constant 0 : index
      %38 = vector.load %arg12[%c0_15, %c0_16] : memref<256x128xf32, #tpu.memory_space<vmem>>, vector<256x128xf32>
      %cst_17 = arith.constant dense<0.000000e+00> : vector<256x128xf32>
      %39 = tpu.matmul %37, %27, %cst_17 {dimension_numbers = #tpu.dot_dimension_numbers<[1], [0], [0], [1], [0, 0, 1, 1], [], []>} : vector<256x256xbf16>, vector<256x128xbf16>, vector<256x128xf32> -> vector<256x128xf32>
      %40 = arith.addf %38, %39 : vector<256x128xf32>
      %c0_18 = arith.constant 0 : index
      %c0_19 = arith.constant 0 : index
      %41 = vector.load %arg12[%c0_18, %c0_19] : memref<256x128xf32, #tpu.memory_space<vmem>>, vector<256x128xf32>
      tpu.vector_store %arg12[%c0_18, %c0_19], %40 {strides = array<i32>} : memref<256x128xf32, #tpu.memory_space<vmem>>, vector<256x128xf32>,
    } else {
    }
    %c4_i32 = arith.constant 4 : i32
    %10 = arith.cmpi eq, %arg1, %c4_i32 : i32
    %11 = arith.extui %10 : i1 to i32
    %c0_i32_2 = arith.constant 0 : i32
    %12 = arith.cmpi ne, %11, %c0_i32_2 : i32
    scf.if %12 {
      %13 = arith.index_cast %1 : i32 to index
      %c0 = arith.constant 0 : index
      %14 = vector.load %arg5[%13, %c0] : memref<512x128xf32, #tpu.memory_space<vmem>>, vector<256x128xf32>
      %c0_3 = arith.constant 0 : index
      %c0_4 = arith.constant 0 : index
      %15 = vector.load %arg12[%c0_3, %c0_4] : memref<256x128xf32, #tpu.memory_space<vmem>>, vector<256x128xf32>
      %c0_5 = arith.constant 0 : index
      %c0_6 = arith.constant 0 : index
      %16 = vector.load %arg10[%c0_5, %c0_6] : memref<256x1xf32, #tpu.memory_space<vmem>>, vector<256x1xf32>
      %17 = vector.broadcast %16 : vector<256x1xf32> to vector<256x128xf32>
      %18 = arith.mulf %15, %17 : vector<256x128xf32>
      %19 = arith.truncf %18 : vector<256x128xf32> to vector<256x128xbf16>
      %20 = arith.truncf %14 : vector<256x128xf32> to vector<256x128xbf16>
      %21 = tpu.concatenate %20, %19 in 1 : vector<256x128xbf16>, vector<256x128xbf16> -> vector<256x256xbf16>
      %c0_7 = arith.constant 0 : index
      %c0_8 = arith.constant 0 : index
      %22 = vector.load %arg9[%c0_7, %c0_8] : memref<256x128xbf16, #tpu.memory_space<vmem>>, vector<256x128xbf16>
      %cst = arith.constant dense<0.000000e+00> : vector<256x128xf32>
      %23 = tpu.matmul %21, %22, %cst {dimension_numbers = #tpu.dot_dimension_numbers<[1], [0], [0], [1], [0, 0, 1, 1], [], []>} : vector<256x256xbf16>, vector<256x128xbf16>, vector<256x128xf32> -> vector<256x128xf32>
      %cst_9 = arith.constant 0.000000e+00 : f32
      %24 = vector.broadcast %cst_9 : f32 to vector<256x128xf32>
      %25 = arith.maximumf %23, %24 : vector<256x128xf32>
      %26 = arith.addf %25, %14 : vector<256x128xf32>
      %c0_10 = arith.constant 0 : index
      %c0_11 = arith.constant 0 : index
      %27 = vector.load %arg11[%c0_10, %c0_11] : memref<256x128xf32, #tpu.memory_space<vmem>>, vector<256x128xf32>
      tpu.vector_store %arg11[%c0_10, %c0_11], %26 {strides = array<i32>} : memref<256x128xf32, #tpu.memory_space<vmem>>, vector<256x128xf32>,
    } else {
    }
    return
  }
  func.func @transform_0(%arg0: i32, %arg1: i32, %arg2: memref<2xi32, #tpu.memory_space<smem>>, %arg3: memref<2xi32, #tpu.memory_space<smem>>, %arg4: memref<2048xi32, #tpu.memory_space<smem>>) -> (i32, i32) {
    %c0_i32 = arith.constant 0 : i32
    %c0_i32_0 = arith.constant 0 : i32
    %c0_i32_1 = arith.constant 0 : i32
    return %c0_i32, %c0_i32_0 : i32, i32
  }
  func.func @transform_1(%arg0: i32, %arg1: i32, %arg2: memref<2xi32, #tpu.memory_space<smem>>, %arg3: memref<2xi32, #tpu.memory_space<smem>>, %arg4: memref<2048xi32, #tpu.memory_space<smem>>) -> (i32, i32) {
    %0 = arith.index_cast %arg0 : i32 to index
    %1 = memref.load %arg2[%0] : memref<2xi32, #tpu.memory_space<smem>>
    %2 = arith.addi %1, %arg1 : i32
    %c7_i32 = arith.constant 7 : i32
    %3 = arith.minsi %2, %c7_i32 : i32
    %c0_i32 = arith.constant 0 : i32
    %c0_i32_0 = arith.constant 0 : i32
    return %3, %c0_i32 : i32, i32
  }
  func.func @transform_2(%arg0: i32, %arg1: i32, %arg2: memref<2xi32, #tpu.memory_space<smem>>, %arg3: memref<2xi32, #tpu.memory_space<smem>>, %arg4: memref<2048xi32, #tpu.memory_space<smem>>) -> (i32, i32, i32) {
    %0 = arith.index_cast %arg0 : i32 to index
    %1 = memref.load %arg2[%0] : memref<2xi32, #tpu.memory_space<smem>>
    %2 = arith.addi %1, %arg1 : i32
    %c7_i32 = arith.constant 7 : i32
    %3 = arith.minsi %2, %c7_i32 : i32
    %c0_i32 = arith.constant 0 : i32
    %c0_i32_0 = arith.constant 0 : i32
    %c0_i32_1 = arith.constant 0 : i32
    return %3, %c0_i32, %c0_i32_0 : i32, i32, i32
  }
  func.func @transform_3(%arg0: i32, %arg1: i32, %arg2: memref<2xi32, #tpu.memory_space<smem>>, %arg3: memref<2xi32, #tpu.memory_space<smem>>, %arg4: memref<2048xi32, #tpu.memory_space<smem>>) -> (i32, i32) {
    %c0_i32 = arith.constant 0 : i32
    %c0_i32_0 = arith.constant 0 : i32
    %c0_i32_1 = arith.constant 0 : i32
    return %c0_i32, %c0_i32_0 : i32, i32
  }
  func.func @transform_4(%arg0: i32, %arg1: i32, %arg2: memref<2xi32, #tpu.memory_space<smem>>, %arg3: memref<2xi32, #tpu.memory_space<smem>>, %arg4: memref<2048xi32, #tpu.memory_space<smem>>) -> (i32, i32) {
    %c0_i32 = arith.constant 0 : i32
    %c0_i32_0 = arith.constant 0 : i32
    %c0_i32_1 = arith.constant 0 : i32
    return %c0_i32, %c0_i32_0 : i32, i32
  }
  func.func @transform_5(%arg0: i32, %arg1: i32, %arg2: memref<2xi32, #tpu.memory_space<smem>>, %arg3: memref<2xi32, #tpu.memory_space<smem>>, %arg4: memref<2048xi32, #tpu.memory_space<smem>>) -> (i32, i32) {
    %c0_i32 = arith.constant 0 : i32
    %c0_i32_0 = arith.constant 0 : i32
    return %arg0, %c0_i32 : i32, i32
  }
  func.func @transform_6(%arg0: i32, %arg1: i32, %arg2: memref<2xi32, #tpu.memory_space<smem>>, %arg3: memref<2xi32, #tpu.memory_space<smem>>, %arg4: memref<2048xi32, #tpu.memory_space<smem>>) -> (i32, i32) {
    %c0_i32 = arith.constant 0 : i32
    %c0_i32_0 = arith.constant 0 : i32
    return %arg0, %c0_i32 : i32, i32
  }
}

</mosaic_0001>

<llo_original>
// kernel: tpu_custom_call.1
$region0: #{tpu_custom_call.1}
  #allocation0 [shape = 'u32[]', space=smem, size = 0x4, offset = 0x4, fixed_abs, tag = 'smem constant byte address 0x4 - core index']
  #allocation1 [shape = 'u32[144,128]{1,0:T(1,128)}', space=vmem, size = 0x12000, scoped, tag = 'internal scratch']
  #allocation2 [shape = 'f32[256,128]{1,0:T(8,128)}', space=vmem, size = 0x20000, scoped, tag = 'scratch operand']
  #allocation3 [shape = 'f32[256,128]{1,0:T(8,128)}', space=vmem, size = 0x20000, scoped, tag = 'scratch operand']
  #allocation4 [shape = 's32[1]{0}', space=sflag, size = 0x4, scoped, tag = 'scoped memory for tpu_custom_call.1']
  #allocation5 [shape = 'u8[512]{0}', space=smem, size = 0x200, scoped, tag = 'prefetched SMEM operand 0']
  #allocation6 [shape = 'u8[512]{0}', space=smem, size = 0x200, scoped, tag = 'prefetched SMEM operand 1']
  #allocation7 [shape = 'u8[8192]{0}', space=smem, size = 0x2000, scoped, tag = 'prefetched SMEM operand 2']
  %s0 = inlined_call_operand.vmem [shape: s32[2], index: 0, kind: input, shape index: {}]
  %s1 = inlined_call_operand.vmem [shape: s32[2], index: 1, kind: input, shape index: {}]
  %s2 = inlined_call_operand.hbm [shape: s32[2048], index: 2, kind: input, shape index: {}]
  %s3 = inlined_call_operand.vmem [shape: f32[512,128], index: 3, kind: input, shape index: {}]
  %s4 = inlined_call_operand.hbm [shape: bf16[2048,128], index: 4, kind: input, shape index: {}]
  %s5 = inlined_call_operand.vmem [shape: s32[8,1,256], index: 5, kind: input, shape index: {}]
  %s6 = inlined_call_operand.hbm [shape: bf16[256,128], index: 6, kind: input, shape index: {}]
  %s7 = inlined_call_operand.hbm [shape: bf16[256,128], index: 7, kind: input, shape index: {}]
  %s8 = inlined_call_operand.vmem [shape: f32[512,1], index: 8, kind: input, shape index: {}]
  %s9 = inlined_call_operand.hbm [shape: f32[512,128], index: 9, kind: output, shape index: {}]
  %s10 = sld [smem:[#allocation0]]
  $region88: #{tpu_custom_call.1} parent=0
    _
  %s12 = ssub.s32 1, %s10
  %s13 = scalar_select 0, %s12, %s10
  %s14 = sshll.u32 %s0, 4
  %s15 = int_to_ptr.vmem [resolvable:$true] %s14
  %17 = dma.vmem_to_smem %s15, 16, [#allocation5], [#allocation4]
  %s18 = sshll.u32 %s1, 4
  %s19 = int_to_ptr.vmem [resolvable:$true] %s18
  %21 = dma.vmem_to_smem %s19, 16, [#allocation6], [#allocation4]
  %23 = dma.hbm_to_smem %s2, 256, [#allocation7], [#allocation4]
  %24 = dma.done [#allocation4], 288
  %25 = sfence
  $region1: #{tpu_custom_call.1} parent=0
    #allocation8 [shape = 'u8[131072]{0}', space=vmem, size = 0x20000, scoped, tag = 'input window, operand 4']
    #allocation9 [shape = 's32[2]{0}', space=sflag, size = 0x8, scoped, tag = 'scoped memory for tpu_custom_call.1']
    #allocation10 [shape = 's32[2]{0}', space=sflag, size = 0x8, scoped, tag = 'scoped memory for tpu_custom_call.1']
    #allocation11 [shape = 'u8[65536]{0}', space=vmem, size = 0x10000, scoped, tag = 'input window, operand 6, single buffered']
    #allocation12 [shape = 's32[1]{0}', space=sflag, size = 0x4, scoped, tag = 'scoped memory for tpu_custom_call.1']
    #allocation13 [shape = 'u8[65536]{0}', space=vmem, size = 0x10000, scoped, tag = 'input window, operand 7, single buffered']
    #allocation14 [shape = 'u8[262144]{0}', space=vmem, size = 0x40000, scoped, tag = 'output window, operand 0']
    %26 = vsyncpa [#allocation9], 0
    %s27 = scalar_lea.sflag [#allocation9], 1
    %28 = vsyncpa %s27, 0
    %29 = vsyncpa [#allocation12], 0
    %30 = vsyncpa [#allocation10], 0
    %s31 = scalar_lea.sflag [#allocation10], 1
    %32 = vsyncpa %s31, 0
    loop: start=0, step=1, limit=12
    $region2: #{tpu_custom_call.1} parent=1 // loop_pre_header
      _
    $region3: #{tpu_custom_call.1} parent=1 // loop_header
      %s34 = sphi 0, %s38
      %p35 = scmp.ge.s32.totalorder %s34, 12
      %s41 = sphi 0, %s53
      %s42 = sphi 0, %s49
      %s43 = sphi 0, %s41
      %s44 = sphi 0, %s42
      %s45 = sphi 0, %s43
      %s46 = sphi 0, %s44
      %s54 = sphi 0, %s54
      %s56 = sphi 0, %s54
      %s57 = sphi 0, %s56
      %s71 = sphi 0, %s57
      %s85 = sphi 0, %s87
      %s88 = sphi 0, %s85
      %s89 = sphi 0, %s88
      %s105 = sphi 0, %s89
      %s119 = sphi 0, %s121
      %s122 = sphi 0, %s119
      %s123 = sphi 0, %s122
      %s139 = sphi 0, %s123
      %s143 = sphi 0, %s143
      %s145 = sphi 0, %s143
      %s146 = sphi 0, %s145
      %s160 = sphi 0, %s146
      %s164 = sphi 0, %s164
      %s166 = sphi 0, %s164
      %s167 = sphi 0, %s166
      %s181 = sphi 0, %s167
      %s187 = sphi 0, %s189
      %s190 = sphi 0, %s187
      %s191 = sphi 0, %s190
      %s207 = sphi 0, %s191
      %s213 = sphi 0, %s215
      %s216 = sphi 0, %s213
      %s217 = sphi 0, %s216
      %s233 = sphi 0, %s217
    $region4: #{tpu_custom_call.1} parent=1 // loop_header_branch
      %37 = sbr.rel (%p35) target = $region8
    $region5: #{tpu_custom_call.1} parent=1 // loop_body
      %s39 = ssub.s32 %s34, 1
      %s40 = ssub.s32 %s34, 2
      %s47 = sadd.s32 1, %s42
      %p48 = scmp.ge.s32.totalorder %s47, 5
      %s49 = scalar_select %p48, 0, %s47
      %s50 = sadd.s32 1, %s41
      %s51 = scalar_select %p48, %s50, %s41
      %p52 = scmp.ge.s32.totalorder %s51, 2
      %s53 = scalar_select %p52, 0, %s51
      %s55 = sadd.s32 %s54, 1
      %p58 = scmp.eq.s32.totalorder %s34, 9
      %p59 = scmp.ne.s32.totalorder %s54, %s56
      %p60 = scmp.eq.s32.totalorder %s34, 0
      %p61 = por %p59, %p60
      %p62 = scmp.ne.s32.totalorder %s54, %s56
      %p63 = scmp.eq.s32.totalorder %s39, 9
      %p64 = por %p62, %p63
      %p65 = scmp.ne.s32.totalorder %s56, %s57
      %p66 = scmp.eq.s32.totalorder %s39, 0
      %p67 = por %p65, %p66
      %p68 = scmp.ne.s32.totalorder %s56, %s57
      %p69 = scmp.eq.s32.totalorder %s40, 9
      %p70 = por %p68, %p69
      %p72 = scmp.ne.s32.totalorder %s57, %s71
      %p73 = scmp.eq.s32.totalorder %s40, 0
      %p74 = por %p72, %p73
      %s75 = sld [smem:[#allocation5 + %s41]]
      %s76 = sadd.s32 %s75, %s42
      %p77 = scmp.lt.s32.totalorder %s76, 7
      %s78 = scalar_select %p77, %s76, 7
      %s79 = sld [smem:[#allocation5 + %s53]]
      %s80 = sadd.s32 %s79, %s49
      %p81 = scmp.lt.s32.totalorder %s80, 7
      %s82 = scalar_select %p81, %s80, 7
      %s83 = ssub.s32 %s78, %s82
      %p84 = scmp.eq.s32.totalorder %s83, 0
      %s86 = sadd.s32 %s85, 1
      %s87 = scalar_select %p84, %s85, %s86
      %p90 = pneg %p84
      %p91 = scmp.eq.s32.totalorder %s34, 9
      %p92 = por %p90, %p91
      %p93 = scmp.ne.s32.totalorder %s85, %s88
      %p94 = scmp.eq.s32.totalorder %s34, 0
      %p95 = por %p93, %p94
      %p96 = scmp.ne.s32.totalorder %s85, %s88
      %p97 = scmp.eq.s32.totalorder %s39, 9
      %p98 = por %p96, %p97
      %p99 = scmp.ne.s32.totalorder %s88, %s89
      %p100 = scmp.eq.s32.totalorder %s39, 0
      %p101 = por %p99, %p100
      %p102 = scmp.ne.s32.totalorder %s88, %s89
      %p103 = scmp.eq.s32.totalorder %s40, 9
      %p104 = por %p102, %p103
      %p106 = scmp.ne.s32.totalorder %s89, %s105
      %p107 = scmp.eq.s32.totalorder %s40, 0
      %p108 = por %p106, %p107
      %s109 = sld [smem:[#allocation5 + %s41]]
      %s110 = sadd.s32 %s109, %s42
      %p111 = scmp.lt.s32.totalorder %s110, 7
      %s112 = scalar_select %p111, %s110, 7
      %s113 = sld [smem:[#allocation5 + %s53]]
      %s114 = sadd.s32 %s113, %s49
      %p115 = scmp.lt.s32.totalorder %s114, 7
      %s116 = scalar_select %p115, %s114, 7
      %s117 = ssub.s32 %s112, %s116
      %p118 = scmp.eq.s32.totalorder %s117, 0
      %s120 = sadd.s32 %s119, 1
      %s121 = scalar_select %p118, %s119, %s120
      %p124 = pneg %p118
      %p125 = scmp.eq.s32.totalorder %s34, 9
      %p126 = por %p124, %p125
      %p127 = scmp.ne.s32.totalorder %s119, %s122
      %p128 = scmp.eq.s32.totalorder %s34, 0
      %p129 = por %p127, %p128
      %p130 = scmp.ne.s32.totalorder %s119, %s122
      %p131 = scmp.eq.s32.totalorder %s39, 9
      %p132 = por %p130, %p131
      %p133 = scmp.ne.s32.totalorder %s122, %s123
      %p134 = scmp.eq.s32.totalorder %s39, 0
      %p135 = por %p133, %p134
      %p136 = scmp.ne.s32.totalorder %s122, %s123
      %p137 = scmp.eq.s32.totalorder %s40, 9
      %p138 = por %p136, %p137
      %p140 = scmp.ne.s32.totalorder %s123, %s139
      %p141 = scmp.eq.s32.totalorder %s40, 0
      %p142 = por %p140, %p141
      %s144 = sadd.s32 %s143, 1
      %p147 = scmp.eq.s32.totalorder %s34, 9
      %p148 = scmp.ne.s32.totalorder %s143, %s145
      %p149 = scmp.eq.s32.totalorder %s34, 0
      %p150 = por %p148, %p149
      %p151 = scmp.ne.s32.totalorder %s143, %s145
      %p152 = scmp.eq.s32.totalorder %s39, 9
      %p153 = por %p151, %p152
      %p154 = scmp.ne.s32.totalorder %s145, %s146
      %p155 = scmp.eq.s32.totalorder %s39, 0
      %p156 = por %p154, %p155
      %p157 = scmp.ne.s32.totalorder %s145, %s146
      %p158 = scmp.eq.s32.totalorder %s40, 9
      %p159 = por %p157, %p158
      %p161 = scmp.ne.s32.totalorder %s146, %s160
      %p162 = scmp.eq.s32.totalorder %s40, 0
      %p163 = por %p161, %p162
      %s165 = sadd.s32 %s164, 1
      %p168 = scmp.eq.s32.totalorder %s34, 9
      %p169 = scmp.ne.s32.totalorder %s164, %s166
      %p170 = scmp.eq.s32.totalorder %s34, 0
      %p171 = por %p169, %p170
      %p172 = scmp.ne.s32.totalorder %s164, %s166
      %p173 = scmp.eq.s32.totalorder %s39, 9
      %p174 = por %p172, %p173
      %p175 = scmp.ne.s32.totalorder %s166, %s167
      %p176 = scmp.eq.s32.totalorder %s39, 0
      %p177 = por %p175, %p176
      %p178 = scmp.ne.s32.totalorder %s166, %s167
      %p179 = scmp.eq.s32.totalorder %s40, 9
      %p180 = por %p178, %p179
      %p182 = scmp.ne.s32.totalorder %s167, %s181
      %p183 = scmp.eq.s32.totalorder %s40, 0
      %p184 = por %p182, %p183
      %s185 = ssub.s32 %s41, %s53
      %p186 = scmp.eq.s32.totalorder %s185, 0
      %s188 = sadd.s32 %s187, 1
      %s189 = scalar_select %p186, %s187, %s188
      %p192 = pneg %p186
      %p193 = scmp.eq.s32.totalorder %s34, 9
      %p194 = por %p192, %p193
      %p195 = scmp.ne.s32.totalorder %s187, %s190
      %p196 = scmp.eq.s32.totalorder %s34, 0
      %p197 = por %p195, %p196
      %p198 = scmp.ne.s32.totalorder %s187, %s190
      %p199 = scmp.eq.s32.totalorder %s39, 9
      %p200 = por %p198, %p199
      %p201 = scmp.ne.s32.totalorder %s190, %s191
      %p202 = scmp.eq.s32.totalorder %s39, 0
      %p203 = por %p201, %p202
      %p204 = scmp.ne.s32.totalorder %s190, %s191
      %p205 = scmp.eq.s32.totalorder %s40, 9
      %p206 = por %p204, %p205
      %p208 = scmp.ne.s32.totalorder %s191, %s207
      %p209 = scmp.eq.s32.totalorder %s40, 0
      %p210 = por %p208, %p209
      %s211 = ssub.s32 %s41, %s53
      %p212 = scmp.eq.s32.totalorder %s211, 0
      %s214 = sadd.s32 %s213, 1
      %s215 = scalar_select %p212, %s213, %s214
      %p218 = pneg %p212
      %p219 = scmp.eq.s32.totalorder %s34, 9
      %p220 = por %p218, %p219
      %p221 = scmp.ne.s32.totalorder %s213, %s216
      %p222 = scmp.eq.s32.totalorder %s34, 0
      %p223 = por %p221, %p222
      %p224 = scmp.ne.s32.totalorder %s213, %s216
      %p225 = scmp.eq.s32.totalorder %s39, 9
      %p226 = por %p224, %p225
      %p227 = scmp.ne.s32.totalorder %s216, %s217
      %p228 = scmp.eq.s32.totalorder %s39, 0
      %p229 = por %p227, %p228
      %p230 = scmp.ne.s32.totalorder %s216, %s217
      %p231 = scmp.eq.s32.totalorder %s40, 9
      %p232 = por %p230, %p231
      %p234 = scmp.ne.s32.totalorder %s217, %s233
      %p235 = scmp.eq.s32.totalorder %s40, 0
      %p236 = por %p234, %p235
      %p237 = scmp.le.s32.totalorder 1, %s34
      %p238 = scmp.lt.s32.totalorder %s34, 11
      %p239 = pnand %p237, %p238
      %p240 = pneg %p239
      // Predicated region
      $region9: #{tpu_custom_call.1} parent=5 // pred_check
        _
      $region10: #{tpu_custom_call.1} parent=5 // pred_check_branch
        %242 = sbr.rel (%p239) target = $region12
      $region11: #{tpu_custom_call.1} parent=5 // pred_region
        %s243 = ssub.s32 %s34, 1
        // Predicated region
        $region13: #{tpu_custom_call.1} parent=11 // pred_check
          %p244 = pneg %p67
        $region14: #{tpu_custom_call.1} parent=11 // pred_check_branch
          %246 = sbr.rel (%p244) target = $region16
        $region15: #{tpu_custom_call.1} parent=11 // pred_region
          _
        $region16: #{tpu_custom_call.1} parent=11 // pred_fallthru
          _
        // Predicated region
        $region17: #{tpu_custom_call.1} parent=11 // pred_check
          %p247 = pneg %p156
        $region18: #{tpu_custom_call.1} parent=11 // pred_check_branch
          %249 = sbr.rel (%p247) target = $region20
        $region19: #{tpu_custom_call.1} parent=11 // pred_region
          %s251 = ssub.s32 2048, 2048
          %252 = vsyncadd [#allocation12], %s251
          %s253 = sshll.u32 [#allocation11], 4
          %s254 = int_to_ptr.vmem [resolvable:$true] %s253
          %259 = dma.hbm_to_vmem [thread:$0]  %s6, 2048, %s254, [#allocation12], 64, 64, 4
        $region20: #{tpu_custom_call.1} parent=11 // pred_fallthru
          _
        // Predicated region
        $region21: #{tpu_custom_call.1} parent=11 // pred_check
          %p260 = pneg %p177
        $region22: #{tpu_custom_call.1} parent=11 // pred_check_branch
          %262 = sbr.rel (%p260) target = $region24
        $region23: #{tpu_custom_call.1} parent=11 // pred_region
          %s264 = ssub.s32 2048, 2048
          %265 = vsyncadd [#allocation12], %s264
          %s266 = sshll.u32 [#allocation13], 4
          %s267 = int_to_ptr.vmem [resolvable:$true] %s266
          %272 = dma.hbm_to_vmem [thread:$0]  %s7, 2048, %s267, [#allocation12], 64, 64, 4
        $region24: #{tpu_custom_call.1} parent=11 // pred_fallthru
          _
      $region12: #{tpu_custom_call.1} parent=5 // pred_fallthru
        _
      %p273 = scmp.lt.s32.totalorder %s34, 10
      // Predicated region
      $region25: #{tpu_custom_call.1} parent=5 // pred_check
        %p274 = pneg %p273
      $region26: #{tpu_custom_call.1} parent=5 // pred_check_branch
        %276 = sbr.rel (%p274) target = $region28
      $region27: #{tpu_custom_call.1} parent=5 // pred_region
        // Predicated region
        $region29: #{tpu_custom_call.1} parent=27 // pred_check
          %p277 = pneg %p95
        $region30: #{tpu_custom_call.1} parent=27 // pred_check_branch
          %279 = sbr.rel (%p277) target = $region32
        $region31: #{tpu_custom_call.1} parent=27 // pred_region
          %s280 = sand.u32 %s85, 1
          %s281 = scalar_lea.sflag [#allocation9], %s280
          %s282 = sand.u32 %s85, 1
          %s283 = smul.addr %s282, 128
          %s284 = scalar_lea.vmem [#allocation8], %s283
          %s285 = sld [smem:[#allocation5 + %s41]]
          %s286 = sadd.s32 %s285, %s42
          %p287 = scmp.lt.s32.totalorder %s286, 7
          %s288 = scalar_select %p287, %s286, 7
          %s289 = smul.u32 32, %s288
          %s291 = ssub.s32 2048, 2048
          %292 = vsyncadd %s281, %s291
          %s293 = smul.addr %s289, 64
          %s294 = scalar_lea.hbm %s4, %s293
          %s295 = sshll.u32 %s284, 4
          %s296 = int_to_ptr.vmem [resolvable:$true] %s295
          %301 = dma.hbm_to_vmem [thread:$0]  %s294, 2048, %s296, %s281, 64, 64, 4
        $region32: #{tpu_custom_call.1} parent=27 // pred_fallthru
          _
        // Predicated region
        $region33: #{tpu_custom_call.1} parent=27 // pred_check
          %p302 = pneg %p129
        $region34: #{tpu_custom_call.1} parent=27 // pred_check_branch
          %304 = sbr.rel (%p302) target = $region36
        $region35: #{tpu_custom_call.1} parent=27 // pred_region
          %s305 = sld [smem:[#allocation5 + %s41]]
          %s306 = sadd.s32 %s305, %s42
          %p307 = scmp.lt.s32.totalorder %s306, 7
          %s308 = scalar_select %p307, %s306, 7
          %p309 = scmp.lt.s32.totalorder %s308, 7
          %s310 = scalar_select %p309, %s308, 7
          %s311 = smul.addr %s310, 2
          %s312 = scalar_lea.vmem %s5, %s311
          %s313 = sld [smem:[#allocation5 + %s41]]
          %s314 = sadd.s32 %s313, %s42
          %p315 = scmp.lt.s32.totalorder %s314, 7
          %s316 = scalar_select %p315, %s314, 7
        $region36: #{tpu_custom_call.1} parent=27 // pred_fallthru
          _
        // Predicated region
        $region37: #{tpu_custom_call.1} parent=27 // pred_check
          %p317 = pneg %p197
        $region38: #{tpu_custom_call.1} parent=27 // pred_check_branch
          %319 = sbr.rel (%p317) target = $region40
        $region39: #{tpu_custom_call.1} parent=27 // pred_region
          %s320 = smul.u32 32, %s41
          %p321 = scmp.lt.s32.totalorder %s320, 63
          %s322 = scalar_select %p321, %s320, 63
          %s323 = smul.addr %s322, 8
          %s324 = scalar_lea.vmem %s8, %s323
          %s325 = smul.u32 32, %s41
        $region40: #{tpu_custom_call.1} parent=27 // pred_fallthru
          _
      $region28: #{tpu_custom_call.1} parent=5 // pred_fallthru
        _
      %p326 = scmp.le.s32.totalorder 1, %s34
      %p327 = scmp.lt.s32.totalorder %s34, 11
      %p328 = pnand %p326, %p327
      %p329 = pneg %p328
      // Predicated region
      $region41: #{tpu_custom_call.1} parent=5 // pred_check
        _
      $region42: #{tpu_custom_call.1} parent=5 // pred_check_branch
        %331 = sbr.rel (%p328) target = $region44
      $region43: #{tpu_custom_call.1} parent=5 // pred_region
        %s332 = ssub.s32 %s34, 1
        %s333 = sand.u32 %s88, 1
        %s334 = scalar_lea.sflag [#allocation9], %s333
        %s335 = sand.u32 %s88, 1
        %s336 = smul.addr %s335, 128
        %s337 = scalar_lea.vmem [#allocation8], %s336
        // Predicated region
        $region45: #{tpu_custom_call.1} parent=43 // pred_check
          %p338 = pneg %p101
        $region46: #{tpu_custom_call.1} parent=43 // pred_check_branch
          %340 = sbr.rel (%p338) target = $region48
        $region47: #{tpu_custom_call.1} parent=43 // pred_region
          %341 = dma.done %s334, 2048
        $region48: #{tpu_custom_call.1} parent=43 // pred_fallthru
          _
        // Predicated region
        $region49: #{tpu_custom_call.1} parent=43 // pred_check
          %p342 = pneg %p156
        $region50: #{tpu_custom_call.1} parent=43 // pred_check_branch
          %344 = sbr.rel (%p342) target = $region52
        $region51: #{tpu_custom_call.1} parent=43 // pred_region
          %345 = dma.done [#allocation12], 2048
        $region52: #{tpu_custom_call.1} parent=43 // pred_fallthru
          _
        // Predicated region
        $region53: #{tpu_custom_call.1} parent=43 // pred_check
          %p346 = pneg %p177
        $region54: #{tpu_custom_call.1} parent=43 // pred_check_branch
          %348 = sbr.rel (%p346) target = $region56
        $region55: #{tpu_custom_call.1} parent=43 // pred_region
          %349 = dma.done [#allocation12], 2048
        $region56: #{tpu_custom_call.1} parent=43 // pred_fallthru
          _
        %p350 = pneg %p67
        %p351 = pneg %p64
        %s352 = sand.u32 %s88, 1
        %s353 = scalar_lea.sflag [#allocation9], %s352
        %s354 = sand.u32 %s88, 1
        %s355 = smul.addr %s354, 128
        %s356 = scalar_lea.vmem [#allocation8], %s355
        %p357 = pneg %p101
        %p358 = pneg %p98
        %s359 = sld [smem:[#allocation5 + %s43]]
        %s360 = sadd.s32 %s359, %s44
        %p361 = scmp.lt.s32.totalorder %s360, 7
        %s362 = scalar_select %p361, %s360, 7
        %p363 = scmp.lt.s32.totalorder %s362, 7
        %s364 = scalar_select %p363, %s362, 7
        %s365 = smul.addr %s364, 2
        %s366 = scalar_lea.vmem %s5, %s365
        %p367 = pneg %p135
        %p368 = pneg %p132
        %p369 = pneg %p156
        %p370 = pneg %p153
        %p371 = pneg %p177
        %p372 = pneg %p174
        %s373 = smul.u32 32, %s43
        %p374 = scmp.lt.s32.totalorder %s373, 63
        %s375 = scalar_select %p374, %s373, 63
        %s376 = smul.addr %s375, 8
        %s377 = scalar_lea.vmem %s8, %s376
        %p378 = pneg %p203
        %p379 = pneg %p200
        %p380 = pneg %p229
        %p381 = pneg %p226
        %s382 = sand.u32 %s216, 1
        %s383 = scalar_lea.sflag [#allocation10], %s382
        %s384 = sand.u32 %s216, 1
        %s385 = smul.addr %s384, 256
        %s386 = scalar_lea.vmem [#allocation14], %s385
        %s387 = sld [smem:[#allocation5 + %s43]]
        %s388 = sadd.s32 %s387, %s44
        %p389 = scmp.lt.s32.totalorder %s388, 7
        %s390 = scalar_select %p389, %s388, 7
        %s391 = smul.u32 32, %s390
        %s392 = sld [smem:[#allocation5 + %s43]]
        %s393 = sadd.s32 %s392, %s44
        %p394 = scmp.lt.s32.totalorder %s393, 7
        %s395 = scalar_select %p394, %s393, 7
        %p396 = scmp.lt.s32.totalorder %s395, 7
        %s397 = scalar_select %p396, %s395, 7
        %s398 = smul.addr %s397, 2
        %s399 = scalar_lea.vmem %s5, %s398
        %s400 = sld [smem:[#allocation5 + %s43]]
        %s401 = sadd.s32 %s400, %s44
        %p402 = scmp.lt.s32.totalorder %s401, 7
        %s403 = scalar_select %p402, %s401, 7
        %s404 = smul.u32 32, %s43
        %p405 = scmp.lt.s32.totalorder %s404, 63
        %s406 = scalar_select %p405, %s404, 63
        %s407 = smul.addr %s406, 8
        %s408 = scalar_lea.vmem %s8, %s407
        %s409 = smul.u32 32, %s43
        %s410 = smul.u32 32, %s43
        %s412 = smul.u32 %s43, 256
        %p413 = scmp.eq.s32.totalorder %s44, 0
        // Predicated region
        $region57: #{tpu_custom_call.1} parent=43 // pred_check
          %p414 = pneg %p413
        $region58: #{tpu_custom_call.1} parent=43 // pred_check_branch
          %416 = sbr.rel (%p414) target = $region60
        $region59: #{tpu_custom_call.1} parent=43 // pred_region
          %417 = vst [vmem:[#allocation2] sm:$0xff] 0.0
          %418 = vst [vmem:[#allocation2 + $0x8] sm:$0xff] 0.0
          %419 = vst [vmem:[#allocation2 + $0x10] sm:$0xff] 0.0
          %420 = vst [vmem:[#allocation2 + $0x18] sm:$0xff] 0.0
          %421 = vst [vmem:[#allocation2 + $0x20] sm:$0xff] 0.0
          %422 = vst [vmem:[#allocation2 + $0x28] sm:$0xff] 0.0
          %423 = vst [vmem:[#allocation2 + $0x30] sm:$0xff] 0.0
          %424 = vst [vmem:[#allocation2 + $0x38] sm:$0xff] 0.0
          %425 = vst [vmem:[#allocation2 + $0x40] sm:$0xff] 0.0
          %426 = vst [vmem:[#allocation2 + $0x48] sm:$0xff] 0.0
          %427 = vst [vmem:[#allocation2 + $0x50] sm:$0xff] 0.0
          %428 = vst [vmem:[#allocation2 + $0x58] sm:$0xff] 0.0
          %429 = vst [vmem:[#allocation2 + $0x60] sm:$0xff] 0.0
          %430 = vst [vmem:[#allocation2 + $0x68] sm:$0xff] 0.0
          %431 = vst [vmem:[#allocation2 + $0x70] sm:$0xff] 0.0
          %432 = vst [vmem:[#allocation2 + $0x78] sm:$0xff] 0.0
          %433 = vst [vmem:[#allocation2 + $0x80] sm:$0xff] 0.0
          %434 = vst [vmem:[#allocation2 + $0x88] sm:$0xff] 0.0
          %435 = vst [vmem:[#allocation2 + $0x90] sm:$0xff] 0.0
          %436 = vst [vmem:[#allocation2 + $0x98] sm:$0xff] 0.0
          %437 = vst [vmem:[#allocation2 + $0xa0] sm:$0xff] 0.0
          %438 = vst [vmem:[#allocation2 + $0xa8] sm:$0xff] 0.0
          %439 = vst [vmem:[#allocation2 + $0xb0] sm:$0xff] 0.0
          %440 = vst [vmem:[#allocation2 + $0xb8] sm:$0xff] 0.0
          %441 = vst [vmem:[#allocation2 + $0xc0] sm:$0xff] 0.0
          %442 = vst [vmem:[#allocation2 + $0xc8] sm:$0xff] 0.0
          %443 = vst [vmem:[#allocation2 + $0xd0] sm:$0xff] 0.0
          %444 = vst [vmem:[#allocation2 + $0xd8] sm:$0xff] 0.0
          %445 = vst [vmem:[#allocation2 + $0xe0] sm:$0xff] 0.0
          %446 = vst [vmem:[#allocation2 + $0xe8] sm:$0xff] 0.0
          %447 = vst [vmem:[#allocation2 + $0xf0] sm:$0xff] 0.0
          %448 = vst [vmem:[#allocation2 + $0xf8] sm:$0xff] 0.0
        $region60: #{tpu_custom_call.1} parent=43 // pred_fallthru
          _
        %s449 = sld [smem:[#allocation6 + %s43]]
        %p450 = scmp.lt.s32.totalorder %s44, %s449
        // Predicated region
        $region61: #{tpu_custom_call.1} parent=43 // pred_check
          %p451 = pneg %p450
        $region62: #{tpu_custom_call.1} parent=43 // pred_check_branch
          %453 = sbr.rel (%p451) target = $region64
        $region63: #{tpu_custom_call.1} parent=43 // pred_region
          %s454 = sld [smem:[#allocation5 + %s43]]
          %s455 = sadd.s32 %s454, %s44
          %s456 = smul.u32 %s455, 256
          loop: start=0, step=1, limit=32
          $region65: #{tpu_custom_call.1} parent=63 // loop_pre_header
            _
          $region66: #{tpu_custom_call.1} parent=63 // loop_header
            %s458 = sphi 0, %s462
            %p459 = scmp.ge.s32.totalorder %s458, 32
          $region67: #{tpu_custom_call.1} parent=63 // loop_header_branch
            %461 = sbr.rel (%p459) target = $region71
          $region68: #{tpu_custom_call.1} parent=63 // loop_body
            %s463 = smul.u32 %s458, 8
            %s464 = sadd.s32 %s456, %s463
            %s465 = sld [smem:[#allocation7 + %s464]]
            %s466 = scalar_lea.vmem %s3, %s465
            %v467 = vld [vmem:[%s466] sm:$0x1]
            %s468 = scalar_lea.vmem [#allocation3], %s463
            %469 = vst [vmem:[%s468] sm:$0x1] %v467
            %s470 = sadd.s32 %s463, 1
            %s471 = sadd.s32 %s456, %s470
            %s472 = sld [smem:[#allocation7 + %s471]]
            %s473 = scalar_lea.vmem %s3, %s472
            %v474 = vld [vmem:[%s473] sm:$0x1]
            %s475 = scalar_lea.vmem [#allocation3], %s470
            %476 = vst [vmem:[%s475] sm:$0x1] %v474
            %s477 = sadd.s32 %s463, 2
            %s478 = sadd.s32 %s456, %s477
            %s479 = sld [smem:[#allocation7 + %s478]]
            %s480 = scalar_lea.vmem %s3, %s479
            %v481 = vld [vmem:[%s480] sm:$0x1]
            %s482 = scalar_lea.vmem [#allocation3], %s477
            %483 = vst [vmem:[%s482] sm:$0x1] %v481
            %s484 = sadd.s32 %s463, 3
            %s485 = sadd.s32 %s456, %s484
            %s486 = sld [smem:[#allocation7 + %s485]]
            %s487 = scalar_lea.vmem %s3, %s486
            %v488 = vld [vmem:[%s487] sm:$0x1]
            %s489 = scalar_lea.vmem [#allocation3], %s484
            %490 = vst [vmem:[%s489] sm:$0x1] %v488
            %s491 = sadd.s32 %s463, 4
            %s492 = sadd.s32 %s456, %s491
            %s493 = sld [smem:[#allocation7 + %s492]]
            %s494 = scalar_lea.vmem %s3, %s493
            %v495 = vld [vmem:[%s494] sm:$0x1]
            %s496 = scalar_lea.vmem [#allocation3], %s491
            %497 = vst [vmem:[%s496] sm:$0x1] %v495
            %s498 = sadd.s32 %s463, 5
            %s499 = sadd.s32 %s456, %s498
            %s500 = sld [smem:[#allocation7 + %s499]]
            %s501 = scalar_lea.vmem %s3, %s500
            %v502 = vld [vmem:[%s501] sm:$0x1]
            %s503 = scalar_lea.vmem [#allocation3], %s498
            %504 = vst [vmem:[%s503] sm:$0x1] %v502
            %s505 = sadd.s32 %s463, 6
            %s506 = sadd.s32 %s456, %s505
            %s507 = sld [smem:[#allocation7 + %s506]]
            %s508 = scalar_lea.vmem %s3, %s507
            %v509 = vld [vmem:[%s508] sm:$0x1]
            %s510 = scalar_lea.vmem [#allocation3], %s505
            %511 = vst [vmem:[%s510] sm:$0x1] %v509
            %s512 = sadd.s32 %s463, 7
            %s513 = sadd.s32 %s456, %s512
            %s514 = sld [smem:[#allocation7 + %s513]]
            %s515 = scalar_lea.vmem %s3, %s514
            %v516 = vld [vmem:[%s515] sm:$0x1]
            %s517 = scalar_lea.vmem [#allocation3], %s512
            %518 = vst [vmem:[%s517] sm:$0x1] %v516
          $region69: #{tpu_custom_call.1} parent=63 // loop_footer
            %s462 = sadd.s32 1, %s458
          $region70: #{tpu_custom_call.1} parent=63 // loop_footer_branch
            %457 = sbr.rel target = $region66
          $region71: #{tpu_custom_call.1} parent=63 // loop_exit
            _
          %v519 = vld [vmem:[#allocation3] sm:$0xff]
          %v520 = vld [vmem:[#allocation3 + $0x8] sm:$0xff]
          %v521 = vld [vmem:[#allocation3 + $0x10] sm:$0xff]
          %v522 = vld [vmem:[#allocation3 + $0x18] sm:$0xff]
          %v523 = vld [vmem:[#allocation3 + $0x20] sm:$0xff]
          %v524 = vld [vmem:[#allocation3 + $0x28] sm:$0xff]
          %v525 = vld [vmem:[#allocation3 + $0x30] sm:$0xff]
          %v526 = vld [vmem:[#allocation3 + $0x38] sm:$0xff]
          %v527 = vld [vmem:[#allocation3 + $0x40] sm:$0xff]
          %v528 = vld [vmem:[#allocation3 + $0x48] sm:$0xff]
          %v529 = vld [vmem:[#allocation3 + $0x50] sm:$0xff]
          %v530 = vld [vmem:[#allocation3 + $0x58] sm:$0xff]
          %v531 = vld [vmem:[#allocation3 + $0x60] sm:$0xff]
          %v532 = vld [vmem:[#allocation3 + $0x68] sm:$0xff]
          %v533 = vld [vmem:[#allocation3 + $0x70] sm:$0xff]
          %v534 = vld [vmem:[#allocation3 + $0x78] sm:$0xff]
          %v535 = vld [vmem:[#allocation3 + $0x80] sm:$0xff]
          %v536 = vld [vmem:[#allocation3 + $0x88] sm:$0xff]
          %v537 = vld [vmem:[#allocation3 + $0x90] sm:$0xff]
          %v538 = vld [vmem:[#allocation3 + $0x98] sm:$0xff]
          %v539 = vld [vmem:[#allocation3 + $0xa0] sm:$0xff]
          %v540 = vld [vmem:[#allocation3 + $0xa8] sm:$0xff]
          %v541 = vld [vmem:[#allocation3 + $0xb0] sm:$0xff]
          %v542 = vld [vmem:[#allocation3 + $0xb8] sm:$0xff]
          %v543 = vld [vmem:[#allocation3 + $0xc0] sm:$0xff]
          %v544 = vld [vmem:[#allocation3 + $0xc8] sm:$0xff]
          %v545 = vld [vmem:[#allocation3 + $0xd0] sm:$0xff]
          %v546 = vld [vmem:[#allocation3 + $0xd8] sm:$0xff]
          %v547 = vld [vmem:[#allocation3 + $0xe0] sm:$0xff]
          %v548 = vld [vmem:[#allocation3 + $0xe8] sm:$0xff]
          %v549 = vld [vmem:[#allocation3 + $0xf0] sm:$0xff]
          %v550 = vld [vmem:[#allocation3 + $0xf8] sm:$0xff]
          %v551 = vpack.c.bf16 %v520, %v519
          %v552 = vpack.c.bf16 %v522, %v521
          %v553 = vpack.c.bf16 %v524, %v523
          %v554 = vpack.c.bf16 %v526, %v525
          %v555 = vpack.c.bf16 %v528, %v527
          %v556 = vpack.c.bf16 %v530, %v529
          %v557 = vpack.c.bf16 %v532, %v531
          %v558 = vpack.c.bf16 %v534, %v533
          %v559 = vpack.c.bf16 %v536, %v535
          %v560 = vpack.c.bf16 %v538, %v537
          %v561 = vpack.c.bf16 %v540, %v539
          %v562 = vpack.c.bf16 %v542, %v541
          %v563 = vpack.c.bf16 %v544, %v543
          %v564 = vpack.c.bf16 %v546, %v545
          %v565 = vpack.c.bf16 %v548, %v547
          %v566 = vpack.c.bf16 %v550, %v549
          %v567 = vld [vmem:[%s337] sm:$0xf]
          %v568 = vld [vmem:[%s337 + $0x4] sm:$0xf]
          %v569 = vld [vmem:[%s337 + $0x8] sm:$0xf]
          %v570 = vld [vmem:[%s337 + $0xc] sm:$0xf]
          %v571 = vld [vmem:[%s337 + $0x10] sm:$0xf]
          %v572 = vld [vmem:[%s337 + $0x14] sm:$0xf]
          %v573 = vld [vmem:[%s337 + $0x18] sm:$0xf]
          %v574 = vld [vmem:[%s337 + $0x1c] sm:$0xf]
          %v575 = vld [vmem:[%s337 + $0x20] sm:$0xf]
          %v576 = vld [vmem:[%s337 + $0x24] sm:$0xf]
          %v577 = vld [vmem:[%s337 + $0x28] sm:$0xf]
          %v578 = vld [vmem:[%s337 + $0x2c] sm:$0xf]
          %v579 = vld [vmem:[%s337 + $0x30] sm:$0xf]
          %v580 = vld [vmem:[%s337 + $0x34] sm:$0xf]
          %v581 = vld [vmem:[%s337 + $0x38] sm:$0xf]
          %v582 = vld [vmem:[%s337 + $0x3c] sm:$0xf]
          %v583 = vld [vmem:[%s337 + $0x40] sm:$0xf]
          %v584 = vld [vmem:[%s337 + $0x44] sm:$0xf]
          %v585 = vld [vmem:[%s337 + $0x48] sm:$0xf]
          %v586 = vld [vmem:[%s337 + $0x4c] sm:$0xf]
          %v587 = vld [vmem:[%s337 + $0x50] sm:$0xf]
          %v588 = vld [vmem:[%s337 + $0x54] sm:$0xf]
          %v589 = vld [vmem:[%s337 + $0x58] sm:$0xf]
          %v590 = vld [vmem:[%s337 + $0x5c] sm:$0xf]
          %v591 = vld [vmem:[%s337 + $0x60] sm:$0xf]
          %v592 = vld [vmem:[%s337 + $0x64] sm:$0xf]
          %v593 = vld [vmem:[%s337 + $0x68] sm:$0xf]
          %v594 = vld [vmem:[%s337 + $0x6c] sm:$0xf]
          %v595 = vld [vmem:[%s337 + $0x70] sm:$0xf]
          %v596 = vld [vmem:[%s337 + $0x74] sm:$0xf]
          %v597 = vld [vmem:[%s337 + $0x78] sm:$0xf]
          %v598 = vld [vmem:[%s337 + $0x7c] sm:$0xf]
          %v631 = vunpack.c.l.b16 %v567
          %v632 = vunpack.c.l.b16 %v568
          %v633 = vunpack.c.l.b16 %v569
          %v634 = vunpack.c.l.b16 %v570
          %v635 = vunpack.c.l.b16 %v571
          %v636 = vunpack.c.l.b16 %v572
          %v637 = vunpack.c.l.b16 %v573
          %v638 = vunpack.c.l.b16 %v574
          %v639 = vunpack.c.l.b16 %v575
          %v640 = vunpack.c.l.b16 %v576
          %v641 = vunpack.c.l.b16 %v577
          %v642 = vunpack.c.l.b16 %v578
          %v643 = vunpack.c.l.b16 %v579
          %v644 = vunpack.c.l.b16 %v580
          %v645 = vunpack.c.l.b16 %v581
          %v646 = vunpack.c.l.b16 %v582
          %v647 = vunpack.c.l.b16 %v583
          %v648 = vunpack.c.l.b16 %v584
          %v649 = vunpack.c.l.b16 %v585
          %v650 = vunpack.c.l.b16 %v586
          %v651 = vunpack.c.l.b16 %v587
          %v652 = vunpack.c.l.b16 %v588
          %v653 = vunpack.c.l.b16 %v589
          %v654 = vunpack.c.l.b16 %v590
          %v655 = vunpack.c.l.b16 %v591
          %v656 = vunpack.c.l.b16 %v592
          %v657 = vunpack.c.l.b16 %v593
          %v658 = vunpack.c.l.b16 %v594
          %v659 = vunpack.c.l.b16 %v595
          %v660 = vunpack.c.l.b16 %v596
          %v661 = vunpack.c.l.b16 %v597
          %v662 = vunpack.c.l.b16 %v598
          %v663 = vpack.c.b16 %v632, %v631
          %v664 = vpack.c.b16 %v634, %v633
          %v665 = vpack.c.b16 %v636, %v635
          %v666 = vpack.c.b16 %v638, %v637
          %v667 = vpack.c.b16 %v640, %v639
          %v668 = vpack.c.b16 %v642, %v641
          %v669 = vpack.c.b16 %v644, %v643
          %v670 = vpack.c.b16 %v646, %v645
          %v671 = vpack.c.b16 %v648, %v647
          %v672 = vpack.c.b16 %v650, %v649
          %v673 = vpack.c.b16 %v652, %v651
          %v674 = vpack.c.b16 %v654, %v653
          %v675 = vpack.c.b16 %v656, %v655
          %v676 = vpack.c.b16 %v658, %v657
          %v677 = vpack.c.b16 %v660, %v659
          %v678 = vpack.c.b16 %v662, %v661
          %v695 = vld [vmem:[#allocation11] sm:$0xf]
          %v696 = vld [vmem:[#allocation11 + $0x4] sm:$0xf]
          %v697 = vld [vmem:[#allocation11 + $0x8] sm:$0xf]
          %v698 = vld [vmem:[#allocation11 + $0xc] sm:$0xf]
          %v699 = vld [vmem:[#allocation11 + $0x10] sm:$0xf]
          %v700 = vld [vmem:[#allocation11 + $0x14] sm:$0xf]
          %v701 = vld [vmem:[#allocation11 + $0x18] sm:$0xf]
          %v702 = vld [vmem:[#allocation11 + $0x1c] sm:$0xf]
          %v703 = vld [vmem:[#allocation11 + $0x20] sm:$0xf]
          %v704 = vld [vmem:[#allocation11 + $0x24] sm:$0xf]
          %v705 = vld [vmem:[#allocation11 + $0x28] sm:$0xf]
          %v706 = vld [vmem:[#allocation11 + $0x2c] sm:$0xf]
          %v707 = vld [vmem:[#allocation11 + $0x30] sm:$0xf]
          %v708 = vld [vmem:[#allocation11 + $0x34] sm:$0xf]
          %v709 = vld [vmem:[#allocation11 + $0x38] sm:$0xf]
          %v710 = vld [vmem:[#allocation11 + $0x3c] sm:$0xf]
          %v711 = vld [vmem:[#allocation11 + $0x40] sm:$0xf]
          %v712 = vld [vmem:[#allocation11 + $0x44] sm:$0xf]
          %v713 = vld [vmem:[#allocation11 + $0x48] sm:$0xf]
          %v714 = vld [vmem:[#allocation11 + $0x4c] sm:$0xf]
          %v715 = vld [vmem:[#allocation11 + $0x50] sm:$0xf]
          %v716 = vld [vmem:[#allocation11 + $0x54] sm:$0xf]
          %v717 = vld [vmem:[#allocation11 + $0x58] sm:$0xf]
          %v718 = vld [vmem:[#allocation11 + $0x5c] sm:$0xf]
          %v719 = vld [vmem:[#allocation11 + $0x60] sm:$0xf]
          %v720 = vld [vmem:[#allocation11 + $0x64] sm:$0xf]
          %v721 = vld [vmem:[#allocation11 + $0x68] sm:$0xf]
          %v722 = vld [vmem:[#allocation11 + $0x6c] sm:$0xf]
          %v723 = vld [vmem:[#allocation11 + $0x70] sm:$0xf]
          %v724 = vld [vmem:[#allocation11 + $0x74] sm:$0xf]
          %v725 = vld [vmem:[#allocation11 + $0x78] sm:$0xf]
          %v726 = vld [vmem:[#allocation11 + $0x7c] sm:$0xf]
          %v759 = vunpack.c.l.b16 %v695
          %v760 = vunpack.c.l.b16 %v696
          %v761 = vunpack.c.l.b16 %v697
          %v762 = vunpack.c.l.b16 %v698
          %v763 = vunpack.c.l.b16 %v699
          %v764 = vunpack.c.l.b16 %v700
          %v765 = vunpack.c.l.b16 %v701
          %v766 = vunpack.c.l.b16 %v702
          %v767 = vunpack.c.l.b16 %v703
          %v768 = vunpack.c.l.b16 %v704
          %v769 = vunpack.c.l.b16 %v705
          %v770 = vunpack.c.l.b16 %v706
          %v771 = vunpack.c.l.b16 %v707
          %v772 = vunpack.c.l.b16 %v708
          %v773 = vunpack.c.l.b16 %v709
          %v774 = vunpack.c.l.b16 %v710
          %v775 = vunpack.c.l.b16 %v711
          %v776 = vunpack.c.l.b16 %v712
          %v777 = vunpack.c.l.b16 %v713
          %v778 = vunpack.c.l.b16 %v714
          %v779 = vunpack.c.l.b16 %v715
          %v780 = vunpack.c.l.b16 %v716
          %v781 = vunpack.c.l.b16 %v717
          %v782 = vunpack.c.l.b16 %v718
          %v783 = vunpack.c.l.b16 %v719
          %v784 = vunpack.c.l.b16 %v720
          %v785 = vunpack.c.l.b16 %v721
          %v786 = vunpack.c.l.b16 %v722
          %v787 = vunpack.c.l.b16 %v723
          %v788 = vunpack.c.l.b16 %v724
          %v789 = vunpack.c.l.b16 %v725
          %v790 = vunpack.c.l.b16 %v726
          %v791 = vpack.c.b16 %v760, %v759
          %v792 = vpack.c.b16 %v762, %v761
          %v793 = vpack.c.b16 %v764, %v763
          %v794 = vpack.c.b16 %v766, %v765
          %v795 = vpack.c.b16 %v768, %v767
          %v796 = vpack.c.b16 %v770, %v769
          %v797 = vpack.c.b16 %v772, %v771
          %v798 = vpack.c.b16 %v774, %v773
          %v799 = vpack.c.b16 %v776, %v775
          %v800 = vpack.c.b16 %v778, %v777
          %v801 = vpack.c.b16 %v780, %v779
          %v802 = vpack.c.b16 %v782, %v781
          %v803 = vpack.c.b16 %v784, %v783
          %v804 = vpack.c.b16 %v786, %v785
          %v805 = vpack.c.b16 %v788, %v787
          %v806 = vpack.c.b16 %v790, %v789
          %823 = vmatprep.subr.bf16.mxu0 0
          %824 = vmatpush1.bf16.msra.mxu0 %v791
          %825 = vmatprep.subr.bf16.mxu0 0
          %826 = vmatpush1.bf16.msra.mxu0 %v792
          %827 = vmatprep.subr.bf16.mxu0 0
          %828 = vmatpush1.bf16.msra.mxu0 %v793
          %829 = vmatprep.subr.bf16.mxu0 0
          %830 = vmatpush1.bf16.msra.mxu0 %v794
          %831 = vmatprep.subr.bf16.mxu0 0
          %832 = vmatpush1.bf16.msra.mxu0 %v795
          %833 = vmatprep.subr.bf16.mxu0 0
          %834 = vmatpush1.bf16.msra.mxu0 %v796
          %835 = vmatprep.subr.bf16.mxu0 0
          %836 = vmatpush1.bf16.msra.mxu0 %v797
          %837 = vmatprep.subr.bf16.mxu0 0
          %838 = vmatpush1.bf16.msra.mxu0 %v798
          %839 = vmatprep.subr.bf16.mxu0 0
          %840 = vmatpush1.bf16.msra.mxu0 %v799
          %841 = vmatprep.subr.bf16.mxu0 0
          %842 = vmatpush1.bf16.msra.mxu0 %v800
          %843 = vmatprep.subr.bf16.mxu0 0
          %844 = vmatpush1.bf16.msra.mxu0 %v801
          %845 = vmatprep.subr.bf16.mxu0 0
          %846 = vmatpush1.bf16.msra.mxu0 %v802
          %847 = vmatprep.subr.bf16.mxu0 0
          %848 = vmatpush1.bf16.msra.mxu0 %v803
          %849 = vmatprep.subr.bf16.mxu0 0
          %850 = vmatpush1.bf16.msra.mxu0 %v804
          %851 = vmatprep.subr.bf16.mxu0 0
          %852 = vmatpush1.bf16.msra.mxu0 %v805
          %853 = vmatprep.subr.bf16.mxu0 0
          %854 = vmatpush1.bf16.msra.mxu0 %v806
          %855 = vmatprep.mubr.bf16.mxu0 %v663
          %856 = vmatmul.mubr.bf16.gmra.mrb[0].mxu0 %v551
          %v857 = vpop.f32.mrb[0].mxu0
          %v858 = vadd.f32 0.0, %v857
          %v859 = vpop.f32.mrb[0].mxu0
          %v860 = vpop.f32.mrb[0].mxu0
          %v861 = vadd.f32 0.0, %v860
          %v862 = vpop.f32.mrb[0].mxu0
          %863 = vmatprep.mubr.bf16.mxu0 %v664
          %864 = vmatmul.mubr.bf16.gmra.mrb[0].mxu0 %v552
          %v865 = vpop.f32.mrb[0].mxu0
          %v866 = vadd.f32 0.0, %v865
          %v867 = vpop.f32.mrb[0].mxu0
          %v868 = vpop.f32.mrb[0].mxu0
          %v869 = vadd.f32 0.0, %v868
          %v870 = vpop.f32.mrb[0].mxu0
          %871 = vmatprep.mubr.bf16.mxu0 %v665
          %872 = vmatmul.mubr.bf16.gmra.mrb[0].mxu0 %v553
          %v873 = vpop.f32.mrb[0].mxu0
          %v874 = vadd.f32 0.0, %v873
          %v875 = vpop.f32.mrb[0].mxu0
          %v876 = vpop.f32.mrb[0].mxu0
          %v877 = vadd.f32 0.0, %v876
          %v878 = vpop.f32.mrb[0].mxu0
          %879 = vmatprep.mubr.bf16.mxu0 %v666
          %880 = vmatmul.mubr.bf16.gmra.mrb[0].mxu0 %v554
          %v881 = vpop.f32.mrb[0].mxu0
          %v882 = vadd.f32 0.0, %v881
          %v883 = vpop.f32.mrb[0].mxu0
          %v884 = vpop.f32.mrb[0].mxu0
          %v885 = vadd.f32 0.0, %v884
          %v886 = vpop.f32.mrb[0].mxu0
          %887 = vmatprep.mubr.bf16.mxu0 %v667
          %888 = vmatmul.mubr.bf16.gmra.mrb[0].mxu0 %v555
          %v889 = vpop.f32.mrb[0].mxu0
          %v890 = vadd.f32 0.0, %v889
          %v891 = vpop.f32.mrb[0].mxu0
          %v892 = vpop.f32.mrb[0].mxu0
          %v893 = vadd.f32 0.0, %v892
          %v894 = vpop.f32.mrb[0].mxu0
          %895 = vmatprep.mubr.bf16.mxu0 %v668
          %896 = vmatmul.mubr.bf16.gmra.mrb[0].mxu0 %v556
          %v897 = vpop.f32.mrb[0].mxu0
          %v898 = vadd.f32 0.0, %v897
          %v899 = vpop.f32.mrb[0].mxu0
          %v900 = vpop.f32.mrb[0].mxu0
          %v901 = vadd.f32 0.0, %v900
          %v902 = vpop.f32.mrb[0].mxu0
          %903 = vmatprep.mubr.bf16.mxu0 %v669
          %904 = vmatmul.mubr.bf16.gmra.mrb[0].mxu0 %v557
          %v905 = vpop.f32.mrb[0].mxu0
          %v906 = vadd.f32 0.0, %v905
          %v907 = vpop.f32.mrb[0].mxu0
          %v908 = vpop.f32.mrb[0].mxu0
          %v909 = vadd.f32 0.0, %v908
          %v910 = vpop.f32.mrb[0].mxu0
          %911 = vmatprep.mubr.bf16.mxu0 %v670
          %912 = vmatmul.mubr.bf16.gmra.mrb[0].mxu0 %v558
          %v913 = vpop.f32.mrb[0].mxu0
          %v914 = vadd.f32 0.0, %v913
          %v915 = vpop.f32.mrb[0].mxu0
          %v916 = vpop.f32.mrb[0].mxu0
          %v917 = vadd.f32 0.0, %v916
          %v918 = vpop.f32.mrb[0].mxu0
          %919 = vmatprep.mubr.bf16.mxu0 %v671
          %920 = vmatmul.mubr.bf16.gmra.mrb[0].mxu0 %v559
          %v921 = vpop.f32.mrb[0].mxu0
          %v922 = vadd.f32 0.0, %v921
          %v923 = vpop.f32.mrb[0].mxu0
          %v924 = vpop.f32.mrb[0].mxu0
          %v925 = vadd.f32 0.0, %v924
          %v926 = vpop.f32.mrb[0].mxu0
          %927 = vmatprep.mubr.bf16.mxu0 %v672
          %928 = vmatmul.mubr.bf16.gmra.mrb[0].mxu0 %v560
          %v929 = vpop.f32.mrb[0].mxu0
          %v930 = vadd.f32 0.0, %v929
          %v931 = vpop.f32.mrb[0].mxu0
          %v932 = vpop.f32.mrb[0].mxu0
          %v933 = vadd.f32 0.0, %v932
          %v934 = vpop.f32.mrb[0].mxu0
          %935 = vmatprep.mubr.bf16.mxu0 %v673
          %936 = vmatmul.mubr.bf16.gmra.mrb[0].mxu0 %v561
          %v937 = vpop.f32.mrb[0].mxu0
          %v938 = vadd.f32 0.0, %v937
          %v939 = vpop.f32.mrb[0].mxu0
          %v940 = vpop.f32.mrb[0].mxu0
          %v941 = vadd.f32 0.0, %v940
          %v942 = vpop.f32.mrb[0].mxu0
          %943 = vmatprep.mubr.bf16.mxu0 %v674
          %944 = vmatmul.mubr.bf16.gmra.mrb[0].mxu0 %v562
          %v945 = vpop.f32.mrb[0].mxu0
          %v946 = vadd.f32 0.0, %v945
          %v947 = vpop.f32.mrb[0].mxu0
          %v948 = vpop.f32.mrb[0].mxu0
          %v949 = vadd.f32 0.0, %v948
          %v950 = vpop.f32.mrb[0].mxu0
          %951 = vmatprep.mubr.bf16.mxu0 %v675
          %952 = vmatmul.mubr.bf16.gmra.mrb[0].mxu0 %v563
          %v953 = vpop.f32.mrb[0].mxu0
          %v954 = vadd.f32 0.0, %v953
          %v955 = vpop.f32.mrb[0].mxu0
          %v956 = vpop.f32.mrb[0].mxu0
          %v957 = vadd.f32 0.0, %v956
          %v958 = vpop.f32.mrb[0].mxu0
          %959 = vmatprep.mubr.bf16.mxu0 %v676
          %960 = vmatmul.mubr.bf16.gmra.mrb[0].mxu0 %v564
          %v961 = vpop.f32.mrb[0].mxu0
          %v962 = vadd.f32 0.0, %v961
          %v963 = vpop.f32.mrb[0].mxu0
          %v964 = vpop.f32.mrb[0].mxu0
          %v965 = vadd.f32 0.0, %v964
          %v966 = vpop.f32.mrb[0].mxu0
          %967 = vmatprep.mubr.bf16.mxu0 %v677
          %968 = vmatmul.mubr.bf16.gmra.mrb[0].mxu0 %v565
          %v969 = vpop.f32.mrb[0].mxu0
          %v970 = vadd.f32 0.0, %v969
          %v971 = vpop.f32.mrb[0].mxu0
          %v972 = vpop.f32.mrb[0].mxu0
          %v973 = vadd.f32 0.0, %v972
          %v974 = vpop.f32.mrb[0].mxu0
          %975 = vmatprep.mubr.bf16.mxu0 %v678
          %976 = vmatmul.mubr.bf16.gmra.mrb[0].mxu0 %v566
          %v977 = vpop.f32.mrb[0].mxu0
          %v978 = vadd.f32 0.0, %v977
          %v979 = vpop.f32.mrb[0].mxu0
          %v980 = vpop.f32.mrb[0].mxu0
          %v981 = vadd.f32 0.0, %v980
          %v982 = vpop.f32.mrb[0].mxu0
          %983 = vdwg.mxu0
          %v984 = vmax.f32 %v858, 0.0
          %v985 = vmax.f32 %v861, 0.0
          %v986 = vmax.f32 %v866, 0.0
          %v987 = vmax.f32 %v869, 0.0
          %v988 = vmax.f32 %v874, 0.0
          %v989 = vmax.f32 %v877, 0.0
          %v990 = vmax.f32 %v882, 0.0
          %v991 = vmax.f32 %v885, 0.0
          %v992 = vmax.f32 %v890, 0.0
          %v993 = vmax.f32 %v893, 0.0
          %v994 = vmax.f32 %v898, 0.0
          %v995 = vmax.f32 %v901, 0.0
          %v996 = vmax.f32 %v906, 0.0
          %v997 = vmax.f32 %v909, 0.0
          %v998 = vmax.f32 %v914, 0.0
          %v999 = vmax.f32 %v917, 0.0
          %v1000 = vmax.f32 %v922, 0.0
          %v1001 = vmax.f32 %v925, 0.0
          %v1002 = vmax.f32 %v930, 0.0
          %v1003 = vmax.f32 %v933, 0.0
          %v1004 = vmax.f32 %v938, 0.0
          %v1005 = vmax.f32 %v941, 0.0
          %v1006 = vmax.f32 %v946, 0.0
          %v1007 = vmax.f32 %v949, 0.0
          %v1008 = vmax.f32 %v954, 0.0
          %v1009 = vmax.f32 %v957, 0.0
          %v1010 = vmax.f32 %v962, 0.0
          %v1011 = vmax.f32 %v965, 0.0
          %v1012 = vmax.f32 %v970, 0.0
          %v1013 = vmax.f32 %v973, 0.0
          %v1014 = vmax.f32 %v978, 0.0
          %v1015 = vmax.f32 %v981, 0.0
          %v1016 = vpack.c.bf16 %v985, %v984
          %v1017 = vpack.c.bf16 %v987, %v986
          %v1018 = vpack.c.bf16 %v989, %v988
          %v1019 = vpack.c.bf16 %v991, %v990
          %v1020 = vpack.c.bf16 %v993, %v992
          %v1021 = vpack.c.bf16 %v995, %v994
          %v1022 = vpack.c.bf16 %v997, %v996
          %v1023 = vpack.c.bf16 %v999, %v998
          %v1024 = vpack.c.bf16 %v1001, %v1000
          %v1025 = vpack.c.bf16 %v1003, %v1002
          %v1026 = vpack.c.bf16 %v1005, %v1004
          %v1027 = vpack.c.bf16 %v1007, %v1006
          %v1028 = vpack.c.bf16 %v1009, %v1008
          %v1029 = vpack.c.bf16 %v1011, %v1010
          %v1030 = vpack.c.bf16 %v1013, %v1012
          %v1031 = vpack.c.bf16 %v1015, %v1014
          %v1032 = vlaneseq
          %v1033 = vshrl.u32 %v1032, 7
          %v1034 = vadd.s32 %v1033, 8
          %v1035 = vadd.s32 %v1033, 16
          %v1036 = vadd.s32 %v1033, 24
          %v1037 = vadd.s32 %v1033, 32
          %v1038 = vadd.s32 %v1033, 40
          %v1039 = vadd.s32 %v1033, 48
          %v1040 = vadd.s32 %v1033, 56
          %v1041 = vadd.s32 %v1033, 64
          %v1042 = vadd.s32 %v1033, 72
          %v1043 = vadd.s32 %v1033, 80
          %v1044 = vadd.s32 %v1033, 88
          %v1045 = vadd.s32 %v1033, 96
          %v1046 = vadd.s32 %v1033, 104
          %v1047 = vadd.s32 %v1033, 112
          %v1048 = vadd.s32 %v1033, 120
          %v1049 = vadd.s32 %v1033, 128
          %v1050 = vadd.s32 %v1033, 136
          %v1051 = vadd.s32 %v1033, 144
          %v1052 = vadd.s32 %v1033, 152
          %v1053 = vadd.s32 %v1033, 160
          %v1054 = vadd.s32 %v1033, 168
          %v1055 = vadd.s32 %v1033, 176
          %v1056 = vadd.s32 %v1033, 184
          %v1057 = vadd.s32 %v1033, 192
          %v1058 = vadd.s32 %v1033, 200
          %v1059 = vadd.s32 %v1033, 208
          %v1060 = vadd.s32 %v1033, 216
          %v1061 = vadd.s32 %v1033, 224
          %v1062 = vadd.s32 %v1033, 232
          %v1063 = vadd.s32 %v1033, 240
          %v1064 = vadd.s32 %v1033, 248
          %v1065 = vstv %s412
          %v1066 = vadd.s32 %v1033, %v1065
          %v1067 = vadd.s32 %v1034, %v1065
          %v1068 = vadd.s32 %v1035, %v1065
          %v1069 = vadd.s32 %v1036, %v1065
          %v1070 = vadd.s32 %v1037, %v1065
          %v1071 = vadd.s32 %v1038, %v1065
          %v1072 = vadd.s32 %v1039, %v1065
          %v1073 = vadd.s32 %v1040, %v1065
          %v1074 = vadd.s32 %v1041, %v1065
          %v1075 = vadd.s32 %v1042, %v1065
          %v1076 = vadd.s32 %v1043, %v1065
          %v1077 = vadd.s32 %v1044, %v1065
          %v1078 = vadd.s32 %v1045, %v1065
          %v1079 = vadd.s32 %v1046, %v1065
          %v1080 = vadd.s32 %v1047, %v1065
          %v1081 = vadd.s32 %v1048, %v1065
          %v1082 = vadd.s32 %v1049, %v1065
          %v1083 = vadd.s32 %v1050, %v1065
          %v1084 = vadd.s32 %v1051, %v1065
          %v1085 = vadd.s32 %v1052, %v1065
          %v1086 = vadd.s32 %v1053, %v1065
          %v1087 = vadd.s32 %v1054, %v1065
          %v1088 = vadd.s32 %v1055, %v1065
          %v1089 = vadd.s32 %v1056, %v1065
          %v1090 = vadd.s32 %v1057, %v1065
          %v1091 = vadd.s32 %v1058, %v1065
          %v1092 = vadd.s32 %v1059, %v1065
          %v1093 = vadd.s32 %v1060, %v1065
          %v1094 = vadd.s32 %v1061, %v1065
          %v1095 = vadd.s32 %v1062, %v1065
          %v1096 = vadd.s32 %v1063, %v1065
          %v1097 = vadd.s32 %v1064, %v1065
          %v1098 = vld [vmem:[%s399] sm:$0x3]
          %v1099 = vlaneseq
          %v1100 = vshrl.u32 %v1099, 7
          %v1101 = vsub.s32 0, %v1100
          %v1102 = vrot.slane %v1098, %v1101
          %v1103 = vlaneseq
          %v1104 = vshrl.u32 %v1103, 7
          %v1105 = vsub.s32 1, %v1104
          %v1106 = vrot.slane %v1098, %v1105
          %vm1107 = vcmp.eq.s32.totalorder %v1066, %v1102
          %vm1108 = vcmp.eq.s32.totalorder %v1066, %v1106
          %vm1109 = vcmp.eq.s32.totalorder %v1067, %v1102
          %vm1110 = vcmp.eq.s32.totalorder %v1067, %v1106
          %vm1111 = vcmp.eq.s32.totalorder %v1068, %v1102
          %vm1112 = vcmp.eq.s32.totalorder %v1068, %v1106
          %vm1113 = vcmp.eq.s32.totalorder %v1069, %v1102
          %vm1114 = vcmp.eq.s32.totalorder %v1069, %v1106
          %vm1115 = vcmp.eq.s32.totalorder %v1070, %v1102
          %vm1116 = vcmp.eq.s32.totalorder %v1070, %v1106
          %vm1117 = vcmp.eq.s32.totalorder %v1071, %v1102
          %vm1118 = vcmp.eq.s32.totalorder %v1071, %v1106
          %vm1119 = vcmp.eq.s32.totalorder %v1072, %v1102
          %vm1120 = vcmp.eq.s32.totalorder %v1072, %v1106
          %vm1121 = vcmp.eq.s32.totalorder %v1073, %v1102
          %vm1122 = vcmp.eq.s32.totalorder %v1073, %v1106
          %vm1123 = vcmp.eq.s32.totalorder %v1074, %v1102
          %vm1124 = vcmp.eq.s32.totalorder %v1074, %v1106
          %vm1125 = vcmp.eq.s32.totalorder %v1075, %v1102
          %vm1126 = vcmp.eq.s32.totalorder %v1075, %v1106
          %vm1127 = vcmp.eq.s32.totalorder %v1076, %v1102
          %vm1128 = vcmp.eq.s32.totalorder %v1076, %v1106
          %vm1129 = vcmp.eq.s32.totalorder %v1077, %v1102
          %vm1130 = vcmp.eq.s32.totalorder %v1077, %v1106
          %vm1131 = vcmp.eq.s32.totalorder %v1078, %v1102
          %vm1132 = vcmp.eq.s32.totalorder %v1078, %v1106
          %vm1133 = vcmp.eq.s32.totalorder %v1079, %v1102
          %vm1134 = vcmp.eq.s32.totalorder %v1079, %v1106
          %vm1135 = vcmp.eq.s32.totalorder %v1080, %v1102
          %vm1136 = vcmp.eq.s32.totalorder %v1080, %v1106
          %vm1137 = vcmp.eq.s32.totalorder %v1081, %v1102
          %vm1138 = vcmp.eq.s32.totalorder %v1081, %v1106
          %vm1139 = vcmp.eq.s32.totalorder %v1082, %v1102
          %vm1140 = vcmp.eq.s32.totalorder %v1082, %v1106
          %vm1141 = vcmp.eq.s32.totalorder %v1083, %v1102
          %vm1142 = vcmp.eq.s32.totalorder %v1083, %v1106
          %vm1143 = vcmp.eq.s32.totalorder %v1084, %v1102
          %vm1144 = vcmp.eq.s32.totalorder %v1084, %v1106
          %vm1145 = vcmp.eq.s32.totalorder %v1085, %v1102
          %vm1146 = vcmp.eq.s32.totalorder %v1085, %v1106
          %vm1147 = vcmp.eq.s32.totalorder %v1086, %v1102
          %vm1148 = vcmp.eq.s32.totalorder %v1086, %v1106
          %vm1149 = vcmp.eq.s32.totalorder %v1087, %v1102
          %vm1150 = vcmp.eq.s32.totalorder %v1087, %v1106
          %vm1151 = vcmp.eq.s32.totalorder %v1088, %v1102
          %vm1152 = vcmp.eq.s32.totalorder %v1088, %v1106
          %vm1153 = vcmp.eq.s32.totalorder %v1089, %v1102
          %vm1154 = vcmp.eq.s32.totalorder %v1089, %v1106
          %vm1155 = vcmp.eq.s32.totalorder %v1090, %v1102
          %vm1156 = vcmp.eq.s32.totalorder %v1090, %v1106
          %vm1157 = vcmp.eq.s32.totalorder %v1091, %v1102
          %vm1158 = vcmp.eq.s32.totalorder %v1091, %v1106
          %vm1159 = vcmp.eq.s32.totalorder %v1092, %v1102
          %vm1160 = vcmp.eq.s32.totalorder %v1092, %v1106
          %vm1161 = vcmp.eq.s32.totalorder %v1093, %v1102
          %vm1162 = vcmp.eq.s32.totalorder %v1093, %v1106
          %vm1163 = vcmp.eq.s32.totalorder %v1094, %v1102
          %vm1164 = vcmp.eq.s32.totalorder %v1094, %v1106
          %vm1165 = vcmp.eq.s32.totalorder %v1095, %v1102
          %vm1166 = vcmp.eq.s32.totalorder %v1095, %v1106
          %vm1167 = vcmp.eq.s32.totalorder %v1096, %v1102
          %vm1168 = vcmp.eq.s32.totalorder %v1096, %v1106
          %vm1169 = vcmp.eq.s32.totalorder %v1097, %v1102
          %vm1170 = vcmp.eq.s32.totalorder %v1097, %v1106
          %v1171 = vsel %vm1107, 1, 0
          %v1172 = vsel %vm1108, 1, 0
          %v1173 = vsel %vm1109, 1, 0
          %v1174 = vsel %vm1110, 1, 0
          %v1175 = vsel %vm1111, 1, 0
          %v1176 = vsel %vm1112, 1, 0
          %v1177 = vsel %vm1113, 1, 0
          %v1178 = vsel %vm1114, 1, 0
          %v1179 = vsel %vm1115, 1, 0
          %v1180 = vsel %vm1116, 1, 0
          %v1181 = vsel %vm1117, 1, 0
          %v1182 = vsel %vm1118, 1, 0
          %v1183 = vsel %vm1119, 1, 0
          %v1184 = vsel %vm1120, 1, 0
          %v1185 = vsel %vm1121, 1, 0
          %v1186 = vsel %vm1122, 1, 0
          %v1187 = vsel %vm1123, 1, 0
          %v1188 = vsel %vm1124, 1, 0
          %v1189 = vsel %vm1125, 1, 0
          %v1190 = vsel %vm1126, 1, 0
          %v1191 = vsel %vm1127, 1, 0
          %v1192 = vsel %vm1128, 1, 0
          %v1193 = vsel %vm1129, 1, 0
          %v1194 = vsel %vm1130, 1, 0
          %v1195 = vsel %vm1131, 1, 0
          %v1196 = vsel %vm1132, 1, 0
          %v1197 = vsel %vm1133, 1, 0
          %v1198 = vsel %vm1134, 1, 0
          %v1199 = vsel %vm1135, 1, 0
          %v1200 = vsel %vm1136, 1, 0
          %v1201 = vsel %vm1137, 1, 0
          %v1202 = vsel %vm1138, 1, 0
          %v1203 = vsel %vm1139, 1, 0
          %v1204 = vsel %vm1140, 1, 0
          %v1205 = vsel %vm1141, 1, 0
          %v1206 = vsel %vm1142, 1, 0
          %v1207 = vsel %vm1143, 1, 0
          %v1208 = vsel %vm1144, 1, 0
          %v1209 = vsel %vm1145, 1, 0
          %v1210 = vsel %vm1146, 1, 0
          %v1211 = vsel %vm1147, 1, 0
          %v1212 = vsel %vm1148, 1, 0
          %v1213 = vsel %vm1149, 1, 0
          %v1214 = vsel %vm1150, 1, 0
          %v1215 = vsel %vm1151, 1, 0
          %v1216 = vsel %vm1152, 1, 0
          %v1217 = vsel %vm1153, 1, 0
          %v1218 = vsel %vm1154, 1, 0
          %v1219 = vsel %vm1155, 1, 0
          %v1220 = vsel %vm1156, 1, 0
          %v1221 = vsel %vm1157, 1, 0
          %v1222 = vsel %vm1158, 1, 0
          %v1223 = vsel %vm1159, 1, 0
          %v1224 = vsel %vm1160, 1, 0
          %v1225 = vsel %vm1161, 1, 0
          %v1226 = vsel %vm1162, 1, 0
          %v1227 = vsel %vm1163, 1, 0
          %v1228 = vsel %vm1164, 1, 0
          %v1229 = vsel %vm1165, 1, 0
          %v1230 = vsel %vm1166, 1, 0
          %v1231 = vsel %vm1167, 1, 0
          %v1232 = vsel %vm1168, 1, 0
          %v1233 = vsel %vm1169, 1, 0
          %v1234 = vsel %vm1170, 1, 0
          %v1235 = vcvt.s32.f32 %v1171
          %v1236 = vcvt.s32.f32 %v1172
          %v1237 = vcvt.s32.f32 %v1173
          %v1238 = vcvt.s32.f32 %v1174
          %v1239 = vcvt.s32.f32 %v1175
          %v1240 = vcvt.s32.f32 %v1176
          %v1241 = vcvt.s32.f32 %v1177
          %v1242 = vcvt.s32.f32 %v1178
          %v1243 = vcvt.s32.f32 %v1179
          %v1244 = vcvt.s32.f32 %v1180
          %v1245 = vcvt.s32.f32 %v1181
          %v1246 = vcvt.s32.f32 %v1182
          %v1247 = vcvt.s32.f32 %v1183
          %v1248 = vcvt.s32.f32 %v1184
          %v1249 = vcvt.s32.f32 %v1185
          %v1250 = vcvt.s32.f32 %v1186
          %v1251 = vcvt.s32.f32 %v1187
          %v1252 = vcvt.s32.f32 %v1188
          %v1253 = vcvt.s32.f32 %v1189
          %v1254 = vcvt.s32.f32 %v1190
          %v1255 = vcvt.s32.f32 %v1191
          %v1256 = vcvt.s32.f32 %v1192
          %v1257 = vcvt.s32.f32 %v1193
          %v1258 = vcvt.s32.f32 %v1194
          %v1259 = vcvt.s32.f32 %v1195
          %v1260 = vcvt.s32.f32 %v1196
          %v1261 = vcvt.s32.f32 %v1197
          %v1262 = vcvt.s32.f32 %v1198
          %v1263 = vcvt.s32.f32 %v1199
          %v1264 = vcvt.s32.f32 %v1200
          %v1265 = vcvt.s32.f32 %v1201
          %v1266 = vcvt.s32.f32 %v1202
          %v1267 = vcvt.s32.f32 %v1203
          %v1268 = vcvt.s32.f32 %v1204
          %v1269 = vcvt.s32.f32 %v1205
          %v1270 = vcvt.s32.f32 %v1206
          %v1271 = vcvt.s32.f32 %v1207
          %v1272 = vcvt.s32.f32 %v1208
          %v1273 = vcvt.s32.f32 %v1209
          %v1274 = vcvt.s32.f32 %v1210
          %v1275 = vcvt.s32.f32 %v1211
          %v1276 = vcvt.s32.f32 %v1212
          %v1277 = vcvt.s32.f32 %v1213
          %v1278 = vcvt.s32.f32 %v1214
          %v1279 = vcvt.s32.f32 %v1215
          %v1280 = vcvt.s32.f32 %v1216
          %v1281 = vcvt.s32.f32 %v1217
          %v1282 = vcvt.s32.f32 %v1218
          %v1283 = vcvt.s32.f32 %v1219
          %v1284 = vcvt.s32.f32 %v1220
          %v1285 = vcvt.s32.f32 %v1221
          %v1286 = vcvt.s32.f32 %v1222
          %v1287 = vcvt.s32.f32 %v1223
          %v1288 = vcvt.s32.f32 %v1224
          %v1289 = vcvt.s32.f32 %v1225
          %v1290 = vcvt.s32.f32 %v1226
          %v1291 = vcvt.s32.f32 %v1227
          %v1292 = vcvt.s32.f32 %v1228
          %v1293 = vcvt.s32.f32 %v1229
          %v1294 = vcvt.s32.f32 %v1230
          %v1295 = vcvt.s32.f32 %v1231
          %v1296 = vcvt.s32.f32 %v1232
          %v1297 = vcvt.s32.f32 %v1233
          %v1298 = vcvt.s32.f32 %v1234
          %v1299 = vpack.c.bf16 %v1237, %v1235
          %v1300 = vpack.c.bf16 %v1238, %v1236
          %v1301 = vpack.c.bf16 %v1241, %v1239
          %v1302 = vpack.c.bf16 %v1242, %v1240
          %v1303 = vpack.c.bf16 %v1245, %v1243
          %v1304 = vpack.c.bf16 %v1246, %v1244
          %v1305 = vpack.c.bf16 %v1249, %v1247
          %v1306 = vpack.c.bf16 %v1250, %v1248
          %v1307 = vpack.c.bf16 %v1253, %v1251
          %v1308 = vpack.c.bf16 %v1254, %v1252
          %v1309 = vpack.c.bf16 %v1257, %v1255
          %v1310 = vpack.c.bf16 %v1258, %v1256
          %v1311 = vpack.c.bf16 %v1261, %v1259
          %v1312 = vpack.c.bf16 %v1262, %v1260
          %v1313 = vpack.c.bf16 %v1265, %v1263
          %v1314 = vpack.c.bf16 %v1266, %v1264
          %v1315 = vpack.c.bf16 %v1269, %v1267
          %v1316 = vpack.c.bf16 %v1270, %v1268
          %v1317 = vpack.c.bf16 %v1273, %v1271
          %v1318 = vpack.c.bf16 %v1274, %v1272
          %v1319 = vpack.c.bf16 %v1277, %v1275
          %v1320 = vpack.c.bf16 %v1278, %v1276
          %v1321 = vpack.c.bf16 %v1281, %v1279
          %v1322 = vpack.c.bf16 %v1282, %v1280
          %v1323 = vpack.c.bf16 %v1285, %v1283
          %v1324 = vpack.c.bf16 %v1286, %v1284
          %v1325 = vpack.c.bf16 %v1289, %v1287
          %v1326 = vpack.c.bf16 %v1290, %v1288
          %v1327 = vpack.c.bf16 %v1293, %v1291
          %v1328 = vpack.c.bf16 %v1294, %v1292
          %v1329 = vpack.c.bf16 %v1297, %v1295
          %v1330 = vpack.c.bf16 %v1298, %v1296
          %v1331 = vld [vmem:[#allocation2] sm:$0xff]
          %v1332 = vld [vmem:[#allocation2 + $0x8] sm:$0xff]
          %v1333 = vld [vmem:[#allocation2 + $0x10] sm:$0xff]
          %v1334 = vld [vmem:[#allocation2 + $0x18] sm:$0xff]
          %v1335 = vld [vmem:[#allocation2 + $0x20] sm:$0xff]
          %v1336 = vld [vmem:[#allocation2 + $0x28] sm:$0xff]
          %v1337 = vld [vmem:[#allocation2 + $0x30] sm:$0xff]
          %v1338 = vld [vmem:[#allocation2 + $0x38] sm:$0xff]
          %v1339 = vld [vmem:[#allocation2 + $0x40] sm:$0xff]
          %v1340 = vld [vmem:[#allocation2 + $0x48] sm:$0xff]
          %v1341 = vld [vmem:[#allocation2 + $0x50] sm:$0xff]
          %v1342 = vld [vmem:[#allocation2 + $0x58] sm:$0xff]
          %v1343 = vld [vmem:[#allocation2 + $0x60] sm:$0xff]
          %v1344 = vld [vmem:[#allocation2 + $0x68] sm:$0xff]
          %v1345 = vld [vmem:[#allocation2 + $0x70] sm:$0xff]
          %v1346 = vld [vmem:[#allocation2 + $0x78] sm:$0xff]
          %v1347 = vld [vmem:[#allocation2 + $0x80] sm:$0xff]
          %v1348 = vld [vmem:[#allocation2 + $0x88] sm:$0xff]
          %v1349 = vld [vmem:[#allocation2 + $0x90] sm:$0xff]
          %v1350 = vld [vmem:[#allocation2 + $0x98] sm:$0xff]
          %v1351 = vld [vmem:[#allocation2 + $0xa0] sm:$0xff]
          %v1352 = vld [vmem:[#allocation2 + $0xa8] sm:$0xff]
          %v1353 = vld [vmem:[#allocation2 + $0xb0] sm:$0xff]
          %v1354 = vld [vmem:[#allocation2 + $0xb8] sm:$0xff]
          %v1355 = vld [vmem:[#allocation2 + $0xc0] sm:$0xff]
          %v1356 = vld [vmem:[#allocation2 + $0xc8] sm:$0xff]
          %v1357 = vld [vmem:[#allocation2 + $0xd0] sm:$0xff]
          %v1358 = vld [vmem:[#allocation2 + $0xd8] sm:$0xff]
          %v1359 = vld [vmem:[#allocation2 + $0xe0] sm:$0xff]
          %v1360 = vld [vmem:[#allocation2 + $0xe8] sm:$0xff]
          %v1361 = vld [vmem:[#allocation2 + $0xf0] sm:$0xff]
          %v1362 = vld [vmem:[#allocation2 + $0xf8] sm:$0xff]
          %1363 = vmatprep.subr.bf16.mxu0 0
          %1364 = vmatpush1.bf16.msra.mxu0 %v1016
          %1365 = vmatprep.subr.bf16.mxu0 0
          %1366 = vmatpush1.bf16.msra.mxu0 %v1017
          %1367 = vmatprep.subr.bf16.mxu0 0
          %1368 = vmatpush1.bf16.msra.mxu0 %v1018
          %1369 = vmatprep.subr.bf16.mxu0 0
          %1370 = vmatpush1.bf16.msra.mxu0 %v1019
          %1371 = vmatprep.subr.bf16.mxu0 0
          %1372 = vmatpush1.bf16.msra.mxu0 %v1020
          %1373 = vmatprep.subr.bf16.mxu0 0
          %1374 = vmatpush1.bf16.msra.mxu0 %v1021
          %1375 = vmatprep.subr.bf16.mxu0 0
          %1376 = vmatpush1.bf16.msra.mxu0 %v1022
          %1377 = vmatprep.subr.bf16.mxu0 0
          %1378 = vmatpush1.bf16.msra.mxu0 %v1023
          %1379 = vmatprep.subr.bf16.mxu0 0
          %1380 = vmatpush1.bf16.msra.mxu0 %v1024
          %1381 = vmatprep.subr.bf16.mxu0 0
          %1382 = vmatpush1.bf16.msra.mxu0 %v1025
          %1383 = vmatprep.subr.bf16.mxu0 0
          %1384 = vmatpush1.bf16.msra.mxu0 %v1026
          %1385 = vmatprep.subr.bf16.mxu0 0
          %1386 = vmatpush1.bf16.msra.mxu0 %v1027
          %1387 = vmatprep.subr.bf16.mxu0 0
          %1388 = vmatpush1.bf16.msra.mxu0 %v1028
          %1389 = vmatprep.subr.bf16.mxu0 0
          %1390 = vmatpush1.bf16.msra.mxu0 %v1029
          %1391 = vmatprep.subr.bf16.mxu0 0
          %1392 = vmatpush1.bf16.msra.mxu0 %v1030
          %1393 = vmatprep.subr.bf16.mxu0 0
          %1394 = vmatpush1.bf16.msra.mxu0 %v1031
          %1395 = vmatprep.mubr.bf16.mxu0 %v1300
          %1396 = vmatmul.mubr.bf16.gmra.mrb[0].mxu0 %v1299
          %v1397 = vpop.f32.mrb[0].mxu0
          %v1398 = vadd.f32 0.0, %v1397
          %v1399 = vpop.f32.mrb[0].mxu0
          %v1400 = vpop.f32.mrb[0].mxu0
          %v1401 = vadd.f32 0.0, %v1400
          %v1402 = vpop.f32.mrb[0].mxu0
          %1403 = vmatprep.mubr.bf16.mxu0 %v1302
          %1404 = vmatmul.mubr.bf16.gmra.mrb[0].mxu0 %v1301
          %v1405 = vpop.f32.mrb[0].mxu0
          %v1406 = vadd.f32 0.0, %v1405
          %v1407 = vpop.f32.mrb[0].mxu0
          %v1408 = vpop.f32.mrb[0].mxu0
          %v1409 = vadd.f32 0.0, %v1408
          %v1410 = vpop.f32.mrb[0].mxu0
          %1411 = vmatprep.mubr.bf16.mxu0 %v1304
          %1412 = vmatmul.mubr.bf16.gmra.mrb[0].mxu0 %v1303
          %v1413 = vpop.f32.mrb[0].mxu0
          %v1414 = vadd.f32 0.0, %v1413
          %v1415 = vpop.f32.mrb[0].mxu0
          %v1416 = vpop.f32.mrb[0].mxu0
          %v1417 = vadd.f32 0.0, %v1416
          %v1418 = vpop.f32.mrb[0].mxu0
          %1419 = vmatprep.mubr.bf16.mxu0 %v1306
          %1420 = vmatmul.mubr.bf16.gmra.mrb[0].mxu0 %v1305
          %v1421 = vpop.f32.mrb[0].mxu0
          %v1422 = vadd.f32 0.0, %v1421
          %v1423 = vpop.f32.mrb[0].mxu0
          %v1424 = vpop.f32.mrb[0].mxu0
          %v1425 = vadd.f32 0.0, %v1424
          %v1426 = vpop.f32.mrb[0].mxu0
          %1427 = vmatprep.mubr.bf16.mxu0 %v1308
          %1428 = vmatmul.mubr.bf16.gmra.mrb[0].mxu0 %v1307
          %v1429 = vpop.f32.mrb[0].mxu0
          %v1430 = vadd.f32 0.0, %v1429
          %v1431 = vpop.f32.mrb[0].mxu0
          %v1432 = vpop.f32.mrb[0].mxu0
          %v1433 = vadd.f32 0.0, %v1432
          %v1434 = vpop.f32.mrb[0].mxu0
          %1435 = vmatprep.mubr.bf16.mxu0 %v1310
          %1436 = vmatmul.mubr.bf16.gmra.mrb[0].mxu0 %v1309
          %v1437 = vpop.f32.mrb[0].mxu0
          %v1438 = vadd.f32 0.0, %v1437
          %v1439 = vpop.f32.mrb[0].mxu0
          %v1440 = vpop.f32.mrb[0].mxu0
          %v1441 = vadd.f32 0.0, %v1440
          %v1442 = vpop.f32.mrb[0].mxu0
          %1443 = vmatprep.mubr.bf16.mxu0 %v1312
          %1444 = vmatmul.mubr.bf16.gmra.mrb[0].mxu0 %v1311
          %v1445 = vpop.f32.mrb[0].mxu0
          %v1446 = vadd.f32 0.0, %v1445
          %v1447 = vpop.f32.mrb[0].mxu0
          %v1448 = vpop.f32.mrb[0].mxu0
          %v1449 = vadd.f32 0.0, %v1448
          %v1450 = vpop.f32.mrb[0].mxu0
          %1451 = vmatprep.mubr.bf16.mxu0 %v1314
          %1452 = vmatmul.mubr.bf16.gmra.mrb[0].mxu0 %v1313
          %v1453 = vpop.f32.mrb[0].mxu0
          %v1454 = vadd.f32 0.0, %v1453
          %v1455 = vpop.f32.mrb[0].mxu0
          %v1456 = vpop.f32.mrb[0].mxu0
          %v1457 = vadd.f32 0.0, %v1456
          %v1458 = vpop.f32.mrb[0].mxu0
          %1459 = vmatprep.mubr.bf16.mxu0 %v1316
          %1460 = vmatmul.mubr.bf16.gmra.mrb[0].mxu0 %v1315
          %v1461 = vpop.f32.mrb[0].mxu0
          %v1462 = vadd.f32 0.0, %v1461
          %v1463 = vpop.f32.mrb[0].mxu0
          %v1464 = vpop.f32.mrb[0].mxu0
          %v1465 = vadd.f32 0.0, %v1464
          %v1466 = vpop.f32.mrb[0].mxu0
          %1467 = vmatprep.mubr.bf16.mxu0 %v1318
          %1468 = vmatmul.mubr.bf16.gmra.mrb[0].mxu0 %v1317
          %v1469 = vpop.f32.mrb[0].mxu0
          %v1470 = vadd.f32 0.0, %v1469
          %v1471 = vpop.f32.mrb[0].mxu0
          %v1472 = vpop.f32.mrb[0].mxu0
          %v1473 = vadd.f32 0.0, %v1472
          %v1474 = vpop.f32.mrb[0].mxu0
          %1475 = vmatprep.mubr.bf16.mxu0 %v1320
          %1476 = vmatmul.mubr.bf16.gmra.mrb[0].mxu0 %v1319
          %v1477 = vpop.f32.mrb[0].mxu0
          %v1478 = vadd.f32 0.0, %v1477
          %v1479 = vpop.f32.mrb[0].mxu0
          %v1480 = vpop.f32.mrb[0].mxu0
          %v1481 = vadd.f32 0.0, %v1480
          %v1482 = vpop.f32.mrb[0].mxu0
          %1483 = vmatprep.mubr.bf16.mxu0 %v1322
          %1484 = vmatmul.mubr.bf16.gmra.mrb[0].mxu0 %v1321
          %v1485 = vpop.f32.mrb[0].mxu0
          %v1486 = vadd.f32 0.0, %v1485
          %v1487 = vpop.f32.mrb[0].mxu0
          %v1488 = vpop.f32.mrb[0].mxu0
          %v1489 = vadd.f32 0.0, %v1488
          %v1490 = vpop.f32.mrb[0].mxu0
          %1491 = vmatprep.mubr.bf16.mxu0 %v1324
          %1492 = vmatmul.mubr.bf16.gmra.mrb[0].mxu0 %v1323
          %v1493 = vpop.f32.mrb[0].mxu0
          %v1494 = vadd.f32 0.0, %v1493
          %v1495 = vpop.f32.mrb[0].mxu0
          %v1496 = vpop.f32.mrb[0].mxu0
          %v1497 = vadd.f32 0.0, %v1496
          %v1498 = vpop.f32.mrb[0].mxu0
          %1499 = vmatprep.mubr.bf16.mxu0 %v1326
          %1500 = vmatmul.mubr.bf16.gmra.mrb[0].mxu0 %v1325
          %v1501 = vpop.f32.mrb[0].mxu0
          %v1502 = vadd.f32 0.0, %v1501
          %v1503 = vpop.f32.mrb[0].mxu0
          %v1504 = vpop.f32.mrb[0].mxu0
          %v1505 = vadd.f32 0.0, %v1504
          %v1506 = vpop.f32.mrb[0].mxu0
          %1507 = vmatprep.mubr.bf16.mxu0 %v1328
          %1508 = vmatmul.mubr.bf16.gmra.mrb[0].mxu0 %v1327
          %v1509 = vpop.f32.mrb[0].mxu0
          %v1510 = vadd.f32 0.0, %v1509
          %v1511 = vpop.f32.mrb[0].mxu0
          %v1512 = vpop.f32.mrb[0].mxu0
          %v1513 = vadd.f32 0.0, %v1512
          %v1514 = vpop.f32.mrb[0].mxu0
          %1515 = vmatprep.mubr.bf16.mxu0 %v1330
          %1516 = vmatmul.mubr.bf16.gmra.mrb[0].mxu0 %v1329
          %v1517 = vpop.f32.mrb[0].mxu0
          %v1518 = vadd.f32 0.0, %v1517
          %v1519 = vpop.f32.mrb[0].mxu0
          %v1520 = vpop.f32.mrb[0].mxu0
          %v1521 = vadd.f32 0.0, %v1520
          %v1522 = vpop.f32.mrb[0].mxu0
          %1523 = vdwg.mxu0
          %v1524 = vadd.f32 %v1331, %v1398
          %v1525 = vadd.f32 %v1332, %v1401
          %v1526 = vadd.f32 %v1333, %v1406
          %v1527 = vadd.f32 %v1334, %v1409
          %v1528 = vadd.f32 %v1335, %v1414
          %v1529 = vadd.f32 %v1336, %v1417
          %v1530 = vadd.f32 %v1337, %v1422
          %v1531 = vadd.f32 %v1338, %v1425
          %v1532 = vadd.f32 %v1339, %v1430
          %v1533 = vadd.f32 %v1340, %v1433
          %v1534 = vadd.f32 %v1341, %v1438
          %v1535 = vadd.f32 %v1342, %v1441
          %v1536 = vadd.f32 %v1343, %v1446
          %v1537 = vadd.f32 %v1344, %v1449
          %v1538 = vadd.f32 %v1345, %v1454
          %v1539 = vadd.f32 %v1346, %v1457
          %v1540 = vadd.f32 %v1347, %v1462
          %v1541 = vadd.f32 %v1348, %v1465
          %v1542 = vadd.f32 %v1349, %v1470
          %v1543 = vadd.f32 %v1350, %v1473
          %v1544 = vadd.f32 %v1351, %v1478
          %v1545 = vadd.f32 %v1352, %v1481
          %v1546 = vadd.f32 %v1353, %v1486
          %v1547 = vadd.f32 %v1354, %v1489
          %v1548 = vadd.f32 %v1355, %v1494
          %v1549 = vadd.f32 %v1356, %v1497
          %v1550 = vadd.f32 %v1357, %v1502
          %v1551 = vadd.f32 %v1358, %v1505
          %v1552 = vadd.f32 %v1359, %v1510
          %v1553 = vadd.f32 %v1360, %v1513
          %v1554 = vadd.f32 %v1361, %v1518
          %v1555 = vadd.f32 %v1362, %v1521
          %1556 = vst [vmem:[#allocation2] sm:$0xff] %v1524
          %1557 = vst [vmem:[#allocation2 + $0x8] sm:$0xff] %v1525
          %1558 = vst [vmem:[#allocation2 + $0x10] sm:$0xff] %v1526
          %1559 = vst [vmem:[#allocation2 + $0x18] sm:$0xff] %v1527
          %1560 = vst [vmem:[#allocation2 + $0x20] sm:$0xff] %v1528
          %1561 = vst [vmem:[#allocation2 + $0x28] sm:$0xff] %v1529
          %1562 = vst [vmem:[#allocation2 + $0x30] sm:$0xff] %v1530
          %1563 = vst [vmem:[#allocation2 + $0x38] sm:$0xff] %v1531
          %1564 = vst [vmem:[#allocation2 + $0x40] sm:$0xff] %v1532
          %1565 = vst [vmem:[#allocation2 + $0x48] sm:$0xff] %v1533
          %1566 = vst [vmem:[#allocation2 + $0x50] sm:$0xff] %v1534
          %1567 = vst [vmem:[#allocation2 + $0x58] sm:$0xff] %v1535
          %1568 = vst [vmem:[#allocation2 + $0x60] sm:$0xff] %v1536
          %1569 = vst [vmem:[#allocation2 + $0x68] sm:$0xff] %v1537
          %1570 = vst [vmem:[#allocation2 + $0x70] sm:$0xff] %v1538
          %1571 = vst [vmem:[#allocation2 + $0x78] sm:$0xff] %v1539
          %1572 = vst [vmem:[#allocation2 + $0x80] sm:$0xff] %v1540
          %1573 = vst [vmem:[#allocation2 + $0x88] sm:$0xff] %v1541
          %1574 = vst [vmem:[#allocation2 + $0x90] sm:$0xff] %v1542
          %1575 = vst [vmem:[#allocation2 + $0x98] sm:$0xff] %v1543
          %1576 = vst [vmem:[#allocation2 + $0xa0] sm:$0xff] %v1544
          %1577 = vst [vmem:[#allocation2 + $0xa8] sm:$0xff] %v1545
          %1578 = vst [vmem:[#allocation2 + $0xb0] sm:$0xff] %v1546
          %1579 = vst [vmem:[#allocation2 + $0xb8] sm:$0xff] %v1547
          %1580 = vst [vmem:[#allocation2 + $0xc0] sm:$0xff] %v1548
          %1581 = vst [vmem:[#allocation2 + $0xc8] sm:$0xff] %v1549
          %1582 = vst [vmem:[#allocation2 + $0xd0] sm:$0xff] %v1550
          %1583 = vst [vmem:[#allocation2 + $0xd8] sm:$0xff] %v1551
          %1584 = vst [vmem:[#allocation2 + $0xe0] sm:$0xff] %v1552
          %1585 = vst [vmem:[#allocation2 + $0xe8] sm:$0xff] %v1553
          %1586 = vst [vmem:[#allocation2 + $0xf0] sm:$0xff] %v1554
          %1587 = vst [vmem:[#allocation2 + $0xf8] sm:$0xff] %v1555
        $region64: #{tpu_custom_call.1} parent=43 // pred_fallthru
          _
        %p1588 = scmp.eq.s32.totalorder %s44, 4
        // Predicated region
        $region72: #{tpu_custom_call.1} parent=43 // pred_check
          %p1589 = pneg %p1588
        $region73: #{tpu_custom_call.1} parent=43 // pred_check_branch
          %1591 = sbr.rel (%p1589) target = $region75
        $region74: #{tpu_custom_call.1} parent=43 // pred_region
          %s1592 = scalar_lea.vmem %s3, %s412
          %v1593 = vld [vmem:[%s1592] sm:$0xff]
          %v1594 = vld [vmem:[%s1592 + $0x8] sm:$0xff]
          %v1595 = vld [vmem:[%s1592 + $0x10] sm:$0xff]
          %v1596 = vld [vmem:[%s1592 + $0x18] sm:$0xff]
          %v1597 = vld [vmem:[%s1592 + $0x20] sm:$0xff]
          %v1598 = vld [vmem:[%s1592 + $0x28] sm:$0xff]
          %v1599 = vld [vmem:[%s1592 + $0x30] sm:$0xff]
          %v1600 = vld [vmem:[%s1592 + $0x38] sm:$0xff]
          %v1601 = vld [vmem:[%s1592 + $0x40] sm:$0xff]
          %v1602 = vld [vmem:[%s1592 + $0x48] sm:$0xff]
          %v1603 = vld [vmem:[%s1592 + $0x50] sm:$0xff]
          %v1604 = vld [vmem:[%s1592 + $0x58] sm:$0xff]
          %v1605 = vld [vmem:[%s1592 + $0x60] sm:$0xff]
          %v1606 = vld [vmem:[%s1592 + $0x68] sm:$0xff]
          %v1607 = vld [vmem:[%s1592 + $0x70] sm:$0xff]
          %v1608 = vld [vmem:[%s1592 + $0x78] sm:$0xff]
          %v1609 = vld [vmem:[%s1592 + $0x80] sm:$0xff]
          %v1610 = vld [vmem:[%s1592 + $0x88] sm:$0xff]
          %v1611 = vld [vmem:[%s1592 + $0x90] sm:$0xff]
          %v1612 = vld [vmem:[%s1592 + $0x98] sm:$0xff]
          %v1613 = vld [vmem:[%s1592 + $0xa0] sm:$0xff]
          %v1614 = vld [vmem:[%s1592 + $0xa8] sm:$0xff]
          %v1615 = vld [vmem:[%s1592 + $0xb0] sm:$0xff]
          %v1616 = vld [vmem:[%s1592 + $0xb8] sm:$0xff]
          %v1617 = vld [vmem:[%s1592 + $0xc0] sm:$0xff]
          %v1618 = vld [vmem:[%s1592 + $0xc8] sm:$0xff]
          %v1619 = vld [vmem:[%s1592 + $0xd0] sm:$0xff]
          %v1620 = vld [vmem:[%s1592 + $0xd8] sm:$0xff]
          %v1621 = vld [vmem:[%s1592 + $0xe0] sm:$0xff]
          %v1622 = vld [vmem:[%s1592 + $0xe8] sm:$0xff]
          %v1623 = vld [vmem:[%s1592 + $0xf0] sm:$0xff]
          %v1624 = vld [vmem:[%s1592 + $0xf8] sm:$0xff]
          %v1625 = vld [vmem:[#allocation2] sm:$0xff]
          %v1626 = vld [vmem:[#allocation2 + $0x8] sm:$0xff]
          %v1627 = vld [vmem:[#allocation2 + $0x10] sm:$0xff]
          %v1628 = vld [vmem:[#allocation2 + $0x18] sm:$0xff]
          %v1629 = vld [vmem:[#allocation2 + $0x20] sm:$0xff]
          %v1630 = vld [vmem:[#allocation2 + $0x28] sm:$0xff]
          %v1631 = vld [vmem:[#allocation2 + $0x30] sm:$0xff]
          %v1632 = vld [vmem:[#allocation2 + $0x38] sm:$0xff]
          %v1633 = vld [vmem:[#allocation2 + $0x40] sm:$0xff]
          %v1634 = vld [vmem:[#allocation2 + $0x48] sm:$0xff]
          %v1635 = vld [vmem:[#allocation2 + $0x50] sm:$0xff]
          %v1636 = vld [vmem:[#allocation2 + $0x58] sm:$0xff]
          %v1637 = vld [vmem:[#allocation2 + $0x60] sm:$0xff]
          %v1638 = vld [vmem:[#allocation2 + $0x68] sm:$0xff]
          %v1639 = vld [vmem:[#allocation2 + $0x70] sm:$0xff]
          %v1640 = vld [vmem:[#allocation2 + $0x78] sm:$0xff]
          %v1641 = vld [vmem:[#allocation2 + $0x80] sm:$0xff]
          %v1642 = vld [vmem:[#allocation2 + $0x88] sm:$0xff]
          %v1643 = vld [vmem:[#allocation2 + $0x90] sm:$0xff]
          %v1644 = vld [vmem:[#allocation2 + $0x98] sm:$0xff]
          %v1645 = vld [vmem:[#allocation2 + $0xa0] sm:$0xff]
          %v1646 = vld [vmem:[#allocation2 + $0xa8] sm:$0xff]
          %v1647 = vld [vmem:[#allocation2 + $0xb0] sm:$0xff]
          %v1648 = vld [vmem:[#allocation2 + $0xb8] sm:$0xff]
          %v1649 = vld [vmem:[#allocation2 + $0xc0] sm:$0xff]
          %v1650 = vld [vmem:[#allocation2 + $0xc8] sm:$0xff]
          %v1651 = vld [vmem:[#allocation2 + $0xd0] sm:$0xff]
          %v1652 = vld [vmem:[#allocation2 + $0xd8] sm:$0xff]
          %v1653 = vld [vmem:[#allocation2 + $0xe0] sm:$0xff]
          %v1654 = vld [vmem:[#allocation2 + $0xe8] sm:$0xff]
          %v1655 = vld [vmem:[#allocation2 + $0xf0] sm:$0xff]
          %v1656 = vld [vmem:[#allocation2 + $0xf8] sm:$0xff]
          %v1657 = vld [vmem:[%s408] sm:$0xff]
          %v1658 = vld [vmem:[%s408 + $0x8] sm:$0xff]
          %v1659 = vld [vmem:[%s408 + $0x10] sm:$0xff]
          %v1660 = vld [vmem:[%s408 + $0x18] sm:$0xff]
          %v1661 = vld [vmem:[%s408 + $0x20] sm:$0xff]
          %v1662 = vld [vmem:[%s408 + $0x28] sm:$0xff]
          %v1663 = vld [vmem:[%s408 + $0x30] sm:$0xff]
          %v1664 = vld [vmem:[%s408 + $0x38] sm:$0xff]
          %v1665 = vld [vmem:[%s408 + $0x40] sm:$0xff]
          %v1666 = vld [vmem:[%s408 + $0x48] sm:$0xff]
          %v1667 = vld [vmem:[%s408 + $0x50] sm:$0xff]
          %v1668 = vld [vmem:[%s408 + $0x58] sm:$0xff]
          %v1669 = vld [vmem:[%s408 + $0x60] sm:$0xff]
          %v1670 = vld [vmem:[%s408 + $0x68] sm:$0xff]
          %v1671 = vld [vmem:[%s408 + $0x70] sm:$0xff]
          %v1672 = vld [vmem:[%s408 + $0x78] sm:$0xff]
          %v1673 = vld [vmem:[%s408 + $0x80] sm:$0xff]
          %v1674 = vld [vmem:[%s408 + $0x88] sm:$0xff]
          %v1675 = vld [vmem:[%s408 + $0x90] sm:$0xff]
          %v1676 = vld [vmem:[%s408 + $0x98] sm:$0xff]
          %v1677 = vld [vmem:[%s408 + $0xa0] sm:$0xff]
          %v1678 = vld [vmem:[%s408 + $0xa8] sm:$0xff]
          %v1679 = vld [vmem:[%s408 + $0xb0] sm:$0xff]
          %v1680 = vld [vmem:[%s408 + $0xb8] sm:$0xff]
          %v1681 = vld [vmem:[%s408 + $0xc0] sm:$0xff]
          %v1682 = vld [vmem:[%s408 + $0xc8] sm:$0xff]
          %v1683 = vld [vmem:[%s408 + $0xd0] sm:$0xff]
          %v1684 = vld [vmem:[%s408 + $0xd8] sm:$0xff]
          %v1685 = vld [vmem:[%s408 + $0xe0] sm:$0xff]
          %v1686 = vld [vmem:[%s408 + $0xe8] sm:$0xff]
          %v1687 = vld [vmem:[%s408 + $0xf0] sm:$0xff]
          %v1688 = vld [vmem:[%s408 + $0xf8] sm:$0xff]
          %1690 = vset.pattern.permute.xlu0 0
          %1691 = vperm.xlu0 %1690, %v1657
          %v1692 = vpop.permute.xlu0 %1691
          %1695 = vset.pattern.permute.xlu0 0
          %1696 = vperm.xlu0 %1695, %v1658
          %v1697 = vpop.permute.xlu0 %1696
          %1700 = vset.pattern.permute.xlu0 0
          %1701 = vperm.xlu0 %1700, %v1659
          %v1702 = vpop.permute.xlu0 %1701
          %1705 = vset.pattern.permute.xlu0 0
          %1706 = vperm.xlu0 %1705, %v1660
          %v1707 = vpop.permute.xlu0 %1706
          %1710 = vset.pattern.permute.xlu0 0
          %1711 = vperm.xlu0 %1710, %v1661
          %v1712 = vpop.permute.xlu0 %1711
          %1715 = vset.pattern.permute.xlu0 0
          %1716 = vperm.xlu0 %1715, %v1662
          %v1717 = vpop.permute.xlu0 %1716
          %1720 = vset.pattern.permute.xlu0 0
          %1721 = vperm.xlu0 %1720, %v1663
          %v1722 = vpop.permute.xlu0 %1721
          %1725 = vset.pattern.permute.xlu0 0
          %1726 = vperm.xlu0 %1725, %v1664
          %v1727 = vpop.permute.xlu0 %1726
          %1730 = vset.pattern.permute.xlu0 0
          %1731 = vperm.xlu0 %1730, %v1665
          %v1732 = vpop.permute.xlu0 %1731
          %1735 = vset.pattern.permute.xlu0 0
          %1736 = vperm.xlu0 %1735, %v1666
          %v1737 = vpop.permute.xlu0 %1736
          %1740 = vset.pattern.permute.xlu0 0
          %1741 = vperm.xlu0 %1740, %v1667
          %v1742 = vpop.permute.xlu0 %1741
          %1745 = vset.pattern.permute.xlu0 0
          %1746 = vperm.xlu0 %1745, %v1668
          %v1747 = vpop.permute.xlu0 %1746
          %1750 = vset.pattern.permute.xlu0 0
          %1751 = vperm.xlu0 %1750, %v1669
          %v1752 = vpop.permute.xlu0 %1751
          %1755 = vset.pattern.permute.xlu0 0
          %1756 = vperm.xlu0 %1755, %v1670
          %v1757 = vpop.permute.xlu0 %1756
          %1760 = vset.pattern.permute.xlu0 0
          %1761 = vperm.xlu0 %1760, %v1671
          %v1762 = vpop.permute.xlu0 %1761
          %1765 = vset.pattern.permute.xlu0 0
          %1766 = vperm.xlu0 %1765, %v1672
          %v1767 = vpop.permute.xlu0 %1766
          %1770 = vset.pattern.permute.xlu0 0
          %1771 = vperm.xlu0 %1770, %v1673
          %v1772 = vpop.permute.xlu0 %1771
          %1775 = vset.pattern.permute.xlu0 0
          %1776 = vperm.xlu0 %1775, %v1674
          %v1777 = vpop.permute.xlu0 %1776
          %1780 = vset.pattern.permute.xlu0 0
          %1781 = vperm.xlu0 %1780, %v1675
          %v1782 = vpop.permute.xlu0 %1781
          %1785 = vset.pattern.permute.xlu0 0
          %1786 = vperm.xlu0 %1785, %v1676
          %v1787 = vpop.permute.xlu0 %1786
          %1790 = vset.pattern.permute.xlu0 0
          %1791 = vperm.xlu0 %1790, %v1677
          %v1792 = vpop.permute.xlu0 %1791
          %1795 = vset.pattern.permute.xlu0 0
          %1796 = vperm.xlu0 %1795, %v1678
          %v1797 = vpop.permute.xlu0 %1796
          %1800 = vset.pattern.permute.xlu0 0
          %1801 = vperm.xlu0 %1800, %v1679
          %v1802 = vpop.permute.xlu0 %1801
          %1805 = vset.pattern.permute.xlu0 0
          %1806 = vperm.xlu0 %1805, %v1680
          %v1807 = vpop.permute.xlu0 %1806
          %1810 = vset.pattern.permute.xlu0 0
          %1811 = vperm.xlu0 %1810, %v1681
          %v1812 = vpop.permute.xlu0 %1811
          %1815 = vset.pattern.permute.xlu0 0
          %1816 = vperm.xlu0 %1815, %v1682
          %v1817 = vpop.permute.xlu0 %1816
          %1820 = vset.pattern.permute.xlu0 0
          %1821 = vperm.xlu0 %1820, %v1683
          %v1822 = vpop.permute.xlu0 %1821
          %1825 = vset.pattern.permute.xlu0 0
          %1826 = vperm.xlu0 %1825, %v1684
          %v1827 = vpop.permute.xlu0 %1826
          %1830 = vset.pattern.permute.xlu0 0
          %1831 = vperm.xlu0 %1830, %v1685
          %v1832 = vpop.permute.xlu0 %1831
          %1835 = vset.pattern.permute.xlu0 0
          %1836 = vperm.xlu0 %1835, %v1686
          %v1837 = vpop.permute.xlu0 %1836
          %1840 = vset.pattern.permute.xlu0 0
          %1841 = vperm.xlu0 %1840, %v1687
          %v1842 = vpop.permute.xlu0 %1841
          %1845 = vset.pattern.permute.xlu0 0
          %1846 = vperm.xlu0 %1845, %v1688
          %v1847 = vpop.permute.xlu0 %1846
          %v1849 = vmul.f32 %v1625, %v1692
          %v1850 = vmul.f32 %v1626, %v1697
          %v1851 = vmul.f32 %v1627, %v1702
          %v1852 = vmul.f32 %v1628, %v1707
          %v1853 = vmul.f32 %v1629, %v1712
          %v1854 = vmul.f32 %v1630, %v1717
          %v1855 = vmul.f32 %v1631, %v1722
          %v1856 = vmul.f32 %v1632, %v1727
          %v1857 = vmul.f32 %v1633, %v1732
          %v1858 = vmul.f32 %v1634, %v1737
          %v1859 = vmul.f32 %v1635, %v1742
          %v1860 = vmul.f32 %v1636, %v1747
          %v1861 = vmul.f32 %v1637, %v1752
          %v1862 = vmul.f32 %v1638, %v1757
          %v1863 = vmul.f32 %v1639, %v1762
          %v1864 = vmul.f32 %v1640, %v1767
          %v1865 = vmul.f32 %v1641, %v1772
          %v1866 = vmul.f32 %v1642, %v1777
          %v1867 = vmul.f32 %v1643, %v1782
          %v1868 = vmul.f32 %v1644, %v1787
          %v1869 = vmul.f32 %v1645, %v1792
          %v1870 = vmul.f32 %v1646, %v1797
          %v1871 = vmul.f32 %v1647, %v1802
          %v1872 = vmul.f32 %v1648, %v1807
          %v1873 = vmul.f32 %v1649, %v1812
          %v1874 = vmul.f32 %v1650, %v1817
          %v1875 = vmul.f32 %v1651, %v1822
          %v1876 = vmul.f32 %v1652, %v1827
          %v1877 = vmul.f32 %v1653, %v1832
          %v1878 = vmul.f32 %v1654, %v1837
          %v1879 = vmul.f32 %v1655, %v1842
          %v1880 = vmul.f32 %v1656, %v1847
          %v1881 = vpack.c.bf16 %v1850, %v1849
          %v1882 = vpack.c.bf16 %v1852, %v1851
          %v1883 = vpack.c.bf16 %v1854, %v1853
          %v1884 = vpack.c.bf16 %v1856, %v1855
          %v1885 = vpack.c.bf16 %v1858, %v1857
          %v1886 = vpack.c.bf16 %v1860, %v1859
          %v1887 = vpack.c.bf16 %v1862, %v1861
          %v1888 = vpack.c.bf16 %v1864, %v1863
          %v1889 = vpack.c.bf16 %v1866, %v1865
          %v1890 = vpack.c.bf16 %v1868, %v1867
          %v1891 = vpack.c.bf16 %v1870, %v1869
          %v1892 = vpack.c.bf16 %v1872, %v1871
          %v1893 = vpack.c.bf16 %v1874, %v1873
          %v1894 = vpack.c.bf16 %v1876, %v1875
          %v1895 = vpack.c.bf16 %v1878, %v1877
          %v1896 = vpack.c.bf16 %v1880, %v1879
          %v1897 = vpack.c.bf16 %v1594, %v1593
          %v1898 = vpack.c.bf16 %v1596, %v1595
          %v1899 = vpack.c.bf16 %v1598, %v1597
          %v1900 = vpack.c.bf16 %v1600, %v1599
          %v1901 = vpack.c.bf16 %v1602, %v1601
          %v1902 = vpack.c.bf16 %v1604, %v1603
          %v1903 = vpack.c.bf16 %v1606, %v1605
          %v1904 = vpack.c.bf16 %v1608, %v1607
          %v1905 = vpack.c.bf16 %v1610, %v1609
          %v1906 = vpack.c.bf16 %v1612, %v1611
          %v1907 = vpack.c.bf16 %v1614, %v1613
          %v1908 = vpack.c.bf16 %v1616, %v1615
          %v1909 = vpack.c.bf16 %v1618, %v1617
          %v1910 = vpack.c.bf16 %v1620, %v1619
          %v1911 = vpack.c.bf16 %v1622, %v1621
          %v1912 = vpack.c.bf16 %v1624, %v1623
          %v1913 = vld [vmem:[#allocation13] sm:$0xf]
          %v1914 = vld [vmem:[#allocation13 + $0x4] sm:$0xf]
          %v1915 = vld [vmem:[#allocation13 + $0x8] sm:$0xf]
          %v1916 = vld [vmem:[#allocation13 + $0xc] sm:$0xf]
          %v1917 = vld [vmem:[#allocation13 + $0x10] sm:$0xf]
          %v1918 = vld [vmem:[#allocation13 + $0x14] sm:$0xf]
          %v1919 = vld [vmem:[#allocation13 + $0x18] sm:$0xf]
          %v1920 = vld [vmem:[#allocation13 + $0x1c] sm:$0xf]
          %v1921 = vld [vmem:[#allocation13 + $0x20] sm:$0xf]
          %v1922 = vld [vmem:[#allocation13 + $0x24] sm:$0xf]
          %v1923 = vld [vmem:[#allocation13 + $0x28] sm:$0xf]
          %v1924 = vld [vmem:[#allocation13 + $0x2c] sm:$0xf]
          %v1925 = vld [vmem:[#allocation13 + $0x30] sm:$0xf]
          %v1926 = vld [vmem:[#allocation13 + $0x34] sm:$0xf]
          %v1927 = vld [vmem:[#allocation13 + $0x38] sm:$0xf]
          %v1928 = vld [vmem:[#allocation13 + $0x3c] sm:$0xf]
          %v1929 = vld [vmem:[#allocation13 + $0x40] sm:$0xf]
          %v1930 = vld [vmem:[#allocation13 + $0x44] sm:$0xf]
          %v1931 = vld [vmem:[#allocation13 + $0x48] sm:$0xf]
          %v1932 = vld [vmem:[#allocation13 + $0x4c] sm:$0xf]
          %v1933 = vld [vmem:[#allocation13 + $0x50] sm:$0xf]
          %v1934 = vld [vmem:[#allocation13 + $0x54] sm:$0xf]
          %v1935 = vld [vmem:[#allocation13 + $0x58] sm:$0xf]
          %v1936 = vld [vmem:[#allocation13 + $0x5c] sm:$0xf]
          %v1937 = vld [vmem:[#allocation13 + $0x60] sm:$0xf]
          %v1938 = vld [vmem:[#allocation13 + $0x64] sm:$0xf]
          %v1939 = vld [vmem:[#allocation13 + $0x68] sm:$0xf]
          %v1940 = vld [vmem:[#allocation13 + $0x6c] sm:$0xf]
          %v1941 = vld [vmem:[#allocation13 + $0x70] sm:$0xf]
          %v1942 = vld [vmem:[#allocation13 + $0x74] sm:$0xf]
          %v1943 = vld [vmem:[#allocation13 + $0x78] sm:$0xf]
          %v1944 = vld [vmem:[#allocation13 + $0x7c] sm:$0xf]
          %v1977 = vunpack.c.l.b16 %v1913
          %v1978 = vunpack.c.l.b16 %v1914
          %v1979 = vunpack.c.l.b16 %v1915
          %v1980 = vunpack.c.l.b16 %v1916
          %v1981 = vunpack.c.l.b16 %v1917
          %v1982 = vunpack.c.l.b16 %v1918
          %v1983 = vunpack.c.l.b16 %v1919
          %v1984 = vunpack.c.l.b16 %v1920
          %v1985 = vunpack.c.l.b16 %v1921
          %v1986 = vunpack.c.l.b16 %v1922
          %v1987 = vunpack.c.l.b16 %v1923
          %v1988 = vunpack.c.l.b16 %v1924
          %v1989 = vunpack.c.l.b16 %v1925
          %v1990 = vunpack.c.l.b16 %v1926
          %v1991 = vunpack.c.l.b16 %v1927
          %v1992 = vunpack.c.l.b16 %v1928
          %v1993 = vunpack.c.l.b16 %v1929
          %v1994 = vunpack.c.l.b16 %v1930
          %v1995 = vunpack.c.l.b16 %v1931
          %v1996 = vunpack.c.l.b16 %v1932
          %v1997 = vunpack.c.l.b16 %v1933
          %v1998 = vunpack.c.l.b16 %v1934
          %v1999 = vunpack.c.l.b16 %v1935
          %v2000 = vunpack.c.l.b16 %v1936
          %v2001 = vunpack.c.l.b16 %v1937
          %v2002 = vunpack.c.l.b16 %v1938
          %v2003 = vunpack.c.l.b16 %v1939
          %v2004 = vunpack.c.l.b16 %v1940
          %v2005 = vunpack.c.l.b16 %v1941
          %v2006 = vunpack.c.l.b16 %v1942
          %v2007 = vunpack.c.l.b16 %v1943
          %v2008 = vunpack.c.l.b16 %v1944
          %v2009 = vpack.c.b16 %v1978, %v1977
          %v2010 = vpack.c.b16 %v1980, %v1979
          %v2011 = vpack.c.b16 %v1982, %v1981
          %v2012 = vpack.c.b16 %v1984, %v1983
          %v2013 = vpack.c.b16 %v1986, %v1985
          %v2014 = vpack.c.b16 %v1988, %v1987
          %v2015 = vpack.c.b16 %v1990, %v1989
          %v2016 = vpack.c.b16 %v1992, %v1991
          %v2017 = vpack.c.b16 %v1994, %v1993
          %v2018 = vpack.c.b16 %v1996, %v1995
          %v2019 = vpack.c.b16 %v1998, %v1997
          %v2020 = vpack.c.b16 %v2000, %v1999
          %v2021 = vpack.c.b16 %v2002, %v2001
          %v2022 = vpack.c.b16 %v2004, %v2003
          %v2023 = vpack.c.b16 %v2006, %v2005
          %v2024 = vpack.c.b16 %v2008, %v2007
          %2041 = vmatprep.subr.bf16.mxu0 0
          %2042 = vmatpush1.bf16.msra.mxu0 %v2009
          %2043 = vmatprep.subr.bf16.mxu0 0
          %2044 = vmatpush1.bf16.msra.mxu0 %v2010
          %2045 = vmatprep.subr.bf16.mxu0 0
          %2046 = vmatpush1.bf16.msra.mxu0 %v2011
          %2047 = vmatprep.subr.bf16.mxu0 0
          %2048 = vmatpush1.bf16.msra.mxu0 %v2012
          %2049 = vmatprep.subr.bf16.mxu0 0
          %2050 = vmatpush1.bf16.msra.mxu0 %v2013
          %2051 = vmatprep.subr.bf16.mxu0 0
          %2052 = vmatpush1.bf16.msra.mxu0 %v2014
          %2053 = vmatprep.subr.bf16.mxu0 0
          %2054 = vmatpush1.bf16.msra.mxu0 %v2015
          %2055 = vmatprep.subr.bf16.mxu0 0
          %2056 = vmatpush1.bf16.msra.mxu0 %v2016
          %2057 = vmatprep.subr.bf16.mxu0 0
          %2058 = vmatpush1.bf16.msra.mxu0 %v2017
          %2059 = vmatprep.subr.bf16.mxu0 0
          %2060 = vmatpush1.bf16.msra.mxu0 %v2018
          %2061 = vmatprep.subr.bf16.mxu0 0
          %2062 = vmatpush1.bf16.msra.mxu0 %v2019
          %2063 = vmatprep.subr.bf16.mxu0 0
          %2064 = vmatpush1.bf16.msra.mxu0 %v2020
          %2065 = vmatprep.subr.bf16.mxu0 0
          %2066 = vmatpush1.bf16.msra.mxu0 %v2021
          %2067 = vmatprep.subr.bf16.mxu0 0
          %2068 = vmatpush1.bf16.msra.mxu0 %v2022
          %2069 = vmatprep.subr.bf16.mxu0 0
          %2070 = vmatpush1.bf16.msra.mxu0 %v2023
          %2071 = vmatprep.subr.bf16.mxu0 0
          %2072 = vmatpush1.bf16.msra.mxu0 %v2024
          %2073 = vmatprep.mubr.bf16.mxu0 %v1881
          %2074 = vmatmul.mubr.bf16.gmra.mrb[0].mxu0 %v1897
          %v2075 = vpop.f32.mrb[0].mxu0
          %v2076 = vadd.f32 0.0, %v2075
          %v2077 = vpop.f32.mrb[0].mxu0
          %v2078 = vpop.f32.mrb[0].mxu0
          %v2079 = vadd.f32 0.0, %v2078
          %v2080 = vpop.f32.mrb[0].mxu0
          %2081 = vmatprep.mubr.bf16.mxu0 %v1882
          %2082 = vmatmul.mubr.bf16.gmra.mrb[0].mxu0 %v1898
          %v2083 = vpop.f32.mrb[0].mxu0
          %v2084 = vadd.f32 0.0, %v2083
          %v2085 = vpop.f32.mrb[0].mxu0
          %v2086 = vpop.f32.mrb[0].mxu0
          %v2087 = vadd.f32 0.0, %v2086
          %v2088 = vpop.f32.mrb[0].mxu0
          %2089 = vmatprep.mubr.bf16.mxu0 %v1883
          %2090 = vmatmul.mubr.bf16.gmra.mrb[0].mxu0 %v1899
          %v2091 = vpop.f32.mrb[0].mxu0
          %v2092 = vadd.f32 0.0, %v2091
          %v2093 = vpop.f32.mrb[0].mxu0
          %v2094 = vpop.f32.mrb[0].mxu0
          %v2095 = vadd.f32 0.0, %v2094
          %v2096 = vpop.f32.mrb[0].mxu0
          %2097 = vmatprep.mubr.bf16.mxu0 %v1884
          %2098 = vmatmul.mubr.bf16.gmra.mrb[0].mxu0 %v1900
          %v2099 = vpop.f32.mrb[0].mxu0
          %v2100 = vadd.f32 0.0, %v2099
          %v2101 = vpop.f32.mrb[0].mxu0
          %v2102 = vpop.f32.mrb[0].mxu0
          %v2103 = vadd.f32 0.0, %v2102
          %v2104 = vpop.f32.mrb[0].mxu0
          %2105 = vmatprep.mubr.bf16.mxu0 %v1885
          %2106 = vmatmul.mubr.bf16.gmra.mrb[0].mxu0 %v1901
          %v2107 = vpop.f32.mrb[0].mxu0
          %v2108 = vadd.f32 0.0, %v2107
          %v2109 = vpop.f32.mrb[0].mxu0
          %v2110 = vpop.f32.mrb[0].mxu0
          %v2111 = vadd.f32 0.0, %v2110
          %v2112 = vpop.f32.mrb[0].mxu0
          %2113 = vmatprep.mubr.bf16.mxu0 %v1886
          %2114 = vmatmul.mubr.bf16.gmra.mrb[0].mxu0 %v1902
          %v2115 = vpop.f32.mrb[0].mxu0
          %v2116 = vadd.f32 0.0, %v2115
          %v2117 = vpop.f32.mrb[0].mxu0
          %v2118 = vpop.f32.mrb[0].mxu0
          %v2119 = vadd.f32 0.0, %v2118
          %v2120 = vpop.f32.mrb[0].mxu0
          %2121 = vmatprep.mubr.bf16.mxu0 %v1887
          %2122 = vmatmul.mubr.bf16.gmra.mrb[0].mxu0 %v1903
          %v2123 = vpop.f32.mrb[0].mxu0
          %v2124 = vadd.f32 0.0, %v2123
          %v2125 = vpop.f32.mrb[0].mxu0
          %v2126 = vpop.f32.mrb[0].mxu0
          %v2127 = vadd.f32 0.0, %v2126
          %v2128 = vpop.f32.mrb[0].mxu0
          %2129 = vmatprep.mubr.bf16.mxu0 %v1888
          %2130 = vmatmul.mubr.bf16.gmra.mrb[0].mxu0 %v1904
          %v2131 = vpop.f32.mrb[0].mxu0
          %v2132 = vadd.f32 0.0, %v2131
          %v2133 = vpop.f32.mrb[0].mxu0
          %v2134 = vpop.f32.mrb[0].mxu0
          %v2135 = vadd.f32 0.0, %v2134
          %v2136 = vpop.f32.mrb[0].mxu0
          %2137 = vmatprep.mubr.bf16.mxu0 %v1889
          %2138 = vmatmul.mubr.bf16.gmra.mrb[0].mxu0 %v1905
          %v2139 = vpop.f32.mrb[0].mxu0
          %v2140 = vadd.f32 0.0, %v2139
          %v2141 = vpop.f32.mrb[0].mxu0
          %v2142 = vpop.f32.mrb[0].mxu0
          %v2143 = vadd.f32 0.0, %v2142
          %v2144 = vpop.f32.mrb[0].mxu0
          %2145 = vmatprep.mubr.bf16.mxu0 %v1890
          %2146 = vmatmul.mubr.bf16.gmra.mrb[0].mxu0 %v1906
          %v2147 = vpop.f32.mrb[0].mxu0
          %v2148 = vadd.f32 0.0, %v2147
          %v2149 = vpop.f32.mrb[0].mxu0
          %v2150 = vpop.f32.mrb[0].mxu0
          %v2151 = vadd.f32 0.0, %v2150
          %v2152 = vpop.f32.mrb[0].mxu0
          %2153 = vmatprep.mubr.bf16.mxu0 %v1891
          %2154 = vmatmul.mubr.bf16.gmra.mrb[0].mxu0 %v1907
          %v2155 = vpop.f32.mrb[0].mxu0
          %v2156 = vadd.f32 0.0, %v2155
          %v2157 = vpop.f32.mrb[0].mxu0
          %v2158 = vpop.f32.mrb[0].mxu0
          %v2159 = vadd.f32 0.0, %v2158
          %v2160 = vpop.f32.mrb[0].mxu0
          %2161 = vmatprep.mubr.bf16.mxu0 %v1892
          %2162 = vmatmul.mubr.bf16.gmra.mrb[0].mxu0 %v1908
          %v2163 = vpop.f32.mrb[0].mxu0
          %v2164 = vadd.f32 0.0, %v2163
          %v2165 = vpop.f32.mrb[0].mxu0
          %v2166 = vpop.f32.mrb[0].mxu0
          %v2167 = vadd.f32 0.0, %v2166
          %v2168 = vpop.f32.mrb[0].mxu0
          %2169 = vmatprep.mubr.bf16.mxu0 %v1893
          %2170 = vmatmul.mubr.bf16.gmra.mrb[0].mxu0 %v1909
          %v2171 = vpop.f32.mrb[0].mxu0
          %v2172 = vadd.f32 0.0, %v2171
          %v2173 = vpop.f32.mrb[0].mxu0
          %v2174 = vpop.f32.mrb[0].mxu0
          %v2175 = vadd.f32 0.0, %v2174
          %v2176 = vpop.f32.mrb[0].mxu0
          %2177 = vmatprep.mubr.bf16.mxu0 %v1894
          %2178 = vmatmul.mubr.bf16.gmra.mrb[0].mxu0 %v1910
          %v2179 = vpop.f32.mrb[0].mxu0
          %v2180 = vadd.f32 0.0, %v2179
          %v2181 = vpop.f32.mrb[0].mxu0
          %v2182 = vpop.f32.mrb[0].mxu0
          %v2183 = vadd.f32 0.0, %v2182
          %v2184 = vpop.f32.mrb[0].mxu0
          %2185 = vmatprep.mubr.bf16.mxu0 %v1895
          %2186 = vmatmul.mubr.bf16.gmra.mrb[0].mxu0 %v1911
          %v2187 = vpop.f32.mrb[0].mxu0
          %v2188 = vadd.f32 0.0, %v2187
          %v2189 = vpop.f32.mrb[0].mxu0
          %v2190 = vpop.f32.mrb[0].mxu0
          %v2191 = vadd.f32 0.0, %v2190
          %v2192 = vpop.f32.mrb[0].mxu0
          %2193 = vmatprep.mubr.bf16.mxu0 %v1896
          %2194 = vmatmul.mubr.bf16.gmra.mrb[0].mxu0 %v1912
          %v2195 = vpop.f32.mrb[0].mxu0
          %v2196 = vadd.f32 0.0, %v2195
          %v2197 = vpop.f32.mrb[0].mxu0
          %v2198 = vpop.f32.mrb[0].mxu0
          %v2199 = vadd.f32 0.0, %v2198
          %v2200 = vpop.f32.mrb[0].mxu0
          %2201 = vdwg.mxu0
          %v2202 = vmax.f32 %v2076, 0.0
          %v2203 = vmax.f32 %v2079, 0.0
          %v2204 = vmax.f32 %v2084, 0.0
          %v2205 = vmax.f32 %v2087, 0.0
          %v2206 = vmax.f32 %v2092, 0.0
          %v2207 = vmax.f32 %v2095, 0.0
          %v2208 = vmax.f32 %v2100, 0.0
          %v2209 = vmax.f32 %v2103, 0.0
          %v2210 = vmax.f32 %v2108, 0.0
          %v2211 = vmax.f32 %v2111, 0.0
          %v2212 = vmax.f32 %v2116, 0.0
          %v2213 = vmax.f32 %v2119, 0.0
          %v2214 = vmax.f32 %v2124, 0.0
          %v2215 = vmax.f32 %v2127, 0.0
          %v2216 = vmax.f32 %v2132, 0.0
          %v2217 = vmax.f32 %v2135, 0.0
          %v2218 = vmax.f32 %v2140, 0.0
          %v2219 = vmax.f32 %v2143, 0.0
          %v2220 = vmax.f32 %v2148, 0.0
          %v2221 = vmax.f32 %v2151, 0.0
          %v2222 = vmax.f32 %v2156, 0.0
          %v2223 = vmax.f32 %v2159, 0.0
          %v2224 = vmax.f32 %v2164, 0.0
          %v2225 = vmax.f32 %v2167, 0.0
          %v2226 = vmax.f32 %v2172, 0.0
          %v2227 = vmax.f32 %v2175, 0.0
          %v2228 = vmax.f32 %v2180, 0.0
          %v2229 = vmax.f32 %v2183, 0.0
          %v2230 = vmax.f32 %v2188, 0.0
          %v2231 = vmax.f32 %v2191, 0.0
          %v2232 = vmax.f32 %v2196, 0.0
          %v2233 = vmax.f32 %v2199, 0.0
          %v2234 = vadd.f32 %v2202, %v1593
          %v2235 = vadd.f32 %v2203, %v1594
          %v2236 = vadd.f32 %v2204, %v1595
          %v2237 = vadd.f32 %v2205, %v1596
          %v2238 = vadd.f32 %v2206, %v1597
          %v2239 = vadd.f32 %v2207, %v1598
          %v2240 = vadd.f32 %v2208, %v1599
          %v2241 = vadd.f32 %v2209, %v1600
          %v2242 = vadd.f32 %v2210, %v1601
          %v2243 = vadd.f32 %v2211, %v1602
          %v2244 = vadd.f32 %v2212, %v1603
          %v2245 = vadd.f32 %v2213, %v1604
          %v2246 = vadd.f32 %v2214, %v1605
          %v2247 = vadd.f32 %v2215, %v1606
          %v2248 = vadd.f32 %v2216, %v1607
          %v2249 = vadd.f32 %v2217, %v1608
          %v2250 = vadd.f32 %v2218, %v1609
          %v2251 = vadd.f32 %v2219, %v1610
          %v2252 = vadd.f32 %v2220, %v1611
          %v2253 = vadd.f32 %v2221, %v1612
          %v2254 = vadd.f32 %v2222, %v1613
          %v2255 = vadd.f32 %v2223, %v1614
          %v2256 = vadd.f32 %v2224, %v1615
          %v2257 = vadd.f32 %v2225, %v1616
          %v2258 = vadd.f32 %v2226, %v1617
          %v2259 = vadd.f32 %v2227, %v1618
          %v2260 = vadd.f32 %v2228, %v1619
          %v2261 = vadd.f32 %v2229, %v1620
          %v2262 = vadd.f32 %v2230, %v1621
          %v2263 = vadd.f32 %v2231, %v1622
          %v2264 = vadd.f32 %v2232, %v1623
          %v2265 = vadd.f32 %v2233, %v1624
          %2266 = vst [vmem:[%s386] sm:$0xff] %v2234
          %2267 = vst [vmem:[%s386 + $0x8] sm:$0xff] %v2235
          %2268 = vst [vmem:[%s386 + $0x10] sm:$0xff] %v2236
          %2269 = vst [vmem:[%s386 + $0x18] sm:$0xff] %v2237
          %2270 = vst [vmem:[%s386 + $0x20] sm:$0xff] %v2238
          %2271 = vst [vmem:[%s386 + $0x28] sm:$0xff] %v2239
          %2272 = vst [vmem:[%s386 + $0x30] sm:$0xff] %v2240
          %2273 = vst [vmem:[%s386 + $0x38] sm:$0xff] %v2241
          %2274 = vst [vmem:[%s386 + $0x40] sm:$0xff] %v2242
          %2275 = vst [vmem:[%s386 + $0x48] sm:$0xff] %v2243
          %2276 = vst [vmem:[%s386 + $0x50] sm:$0xff] %v2244
          %2277 = vst [vmem:[%s386 + $0x58] sm:$0xff] %v2245
          %2278 = vst [vmem:[%s386 + $0x60] sm:$0xff] %v2246
          %2279 = vst [vmem:[%s386 + $0x68] sm:$0xff] %v2247
          %2280 = vst [vmem:[%s386 + $0x70] sm:$0xff] %v2248
          %2281 = vst [vmem:[%s386 + $0x78] sm:$0xff] %v2249
          %2282 = vst [vmem:[%s386 + $0x80] sm:$0xff] %v2250
          %2283 = vst [vmem:[%s386 + $0x88] sm:$0xff] %v2251
          %2284 = vst [vmem:[%s386 + $0x90] sm:$0xff] %v2252
          %2285 = vst [vmem:[%s386 + $0x98] sm:$0xff] %v2253
          %2286 = vst [vmem:[%s386 + $0xa0] sm:$0xff] %v2254
          %2287 = vst [vmem:[%s386 + $0xa8] sm:$0xff] %v2255
          %2288 = vst [vmem:[%s386 + $0xb0] sm:$0xff] %v2256
          %2289 = vst [vmem:[%s386 + $0xb8] sm:$0xff] %v2257
          %2290 = vst [vmem:[%s386 + $0xc0] sm:$0xff] %v2258
          %2291 = vst [vmem:[%s386 + $0xc8] sm:$0xff] %v2259
          %2292 = vst [vmem:[%s386 + $0xd0] sm:$0xff] %v2260
          %2293 = vst [vmem:[%s386 + $0xd8] sm:$0xff] %v2261
          %2294 = vst [vmem:[%s386 + $0xe0] sm:$0xff] %v2262
          %2295 = vst [vmem:[%s386 + $0xe8] sm:$0xff] %v2263
          %2296 = vst [vmem:[%s386 + $0xf0] sm:$0xff] %v2264
          %2297 = vst [vmem:[%s386 + $0xf8] sm:$0xff] %v2265
        $region75: #{tpu_custom_call.1} parent=43 // pred_fallthru
          _
        %s2298 = sand.u32 %s216, 1
        %s2299 = scalar_lea.sflag [#allocation10], %s2298
        %s2300 = sand.u32 %s216, 1
        %s2301 = smul.addr %s2300, 256
        %s2302 = scalar_lea.vmem [#allocation14], %s2301
        // Predicated region
        $region76: #{tpu_custom_call.1} parent=43 // pred_check
          %p2303 = pneg %p226
        $region77: #{tpu_custom_call.1} parent=43 // pred_check_branch
          %2305 = sbr.rel (%p2303) target = $region79
        $region78: #{tpu_custom_call.1} parent=43 // pred_region
          %s2306 = smul.u32 32, %s43
          %s2308 = ssub.s32 4096, 4096
          %2309 = vsyncadd %s2299, %s2308
          %s2310 = smul.addr %s2306, 128
          %s2311 = scalar_lea.hbm %s9, %s2310
          %s2312 = sshll.u32 %s2302, 4
          %s2313 = int_to_ptr.vmem [resolvable:$true] %s2312
          %2318 = dma.vmem_to_hbm [thread:$0]  %s2313, 4096, %s2311, %s2299, 128, 128, 8
        $region79: #{tpu_custom_call.1} parent=43 // pred_fallthru
          _
      $region44: #{tpu_custom_call.1} parent=5 // pred_fallthru
        _
      %p2319 = scmp.le.s32.totalorder 2, %s34
      // Predicated region
      $region80: #{tpu_custom_call.1} parent=5 // pred_check
        %p2320 = pneg %p2319
      $region81: #{tpu_custom_call.1} parent=5 // pred_check_branch
        %2322 = sbr.rel (%p2320) target = $region83
      $region82: #{tpu_custom_call.1} parent=5 // pred_region
        %s2323 = ssub.s32 %s34, 2
        // Predicated region
        $region84: #{tpu_custom_call.1} parent=82 // pred_check
          %p2324 = pneg %p232
        $region85: #{tpu_custom_call.1} parent=82 // pred_check_branch
          %2326 = sbr.rel (%p2324) target = $region87
        $region86: #{tpu_custom_call.1} parent=82 // pred_region
          %s2327 = sand.u32 %s217, 1
          %s2328 = scalar_lea.sflag [#allocation10], %s2327
          %s2329 = sand.u32 %s217, 1
          %s2330 = smul.addr %s2329, 256
          %s2331 = scalar_lea.vmem [#allocation14], %s2330
          %2332 = dma.done %s2328, 4096
        $region87: #{tpu_custom_call.1} parent=82 // pred_fallthru
          _
      $region83: #{tpu_custom_call.1} parent=5 // pred_fallthru
        _
    $region6: #{tpu_custom_call.1} parent=1 // loop_footer
      %s38 = sadd.s32 1, %s34
    $region7: #{tpu_custom_call.1} parent=1 // loop_footer_branch
      %33 = sbr.rel target = $region3
    $region8: #{tpu_custom_call.1} parent=1 // loop_exit
      _
    %2333 = vsyncpa [#allocation9], 1
    %s2334 = scalar_lea.sflag [#allocation9], 1
    %2335 = vsyncpa %s2334, 1
    %2336 = vsyncpa [#allocation12], 1
    %2337 = vsyncpa [#allocation10], 1
    %s2338 = scalar_lea.sflag [#allocation10], 1
    %2339 = vsyncpa %s2338, 1

</llo_original>
